<compile_context>
chip_gen: v5e
topology: v5e:2x2
jax: 0.10.0
libtpu: 0.0.40
codegen_flags: <defaults>
</compile_context>

<pallas_src>
import functools
import math

import jax
import jax.numpy as jnp
from jax.experimental import pallas as pl
from jax.experimental.pallas import tpu as pltpu

LANE = 128     # pad feature dims to multiples of the TPU lane width
SUBLANE = 8    # batch-tile granularity

# ReLU pattern exactly matching the PyTorch Sequential:
# Encoder: Lin(F,F) | Lin(F,3F/4)+ReLU | Lin(3F/4,F/2)+ReLU |
#          Lin(F/2,F/4)+ReLU | Lin(F/4,latent)
# Decoder: Lin(latent,F/4)+ReLU | Lin(F/4,F/2)+ReLU | Lin(F/2,3F/4)+ReLU |
#          Lin(3F/4,F) | Lin(F,F)
RELU_FLAGS = (False, True, True, True, False, True, True, True, False, False)


def layer_dims(in_features, latent):
    f34 = int(in_features * 3 / 4)
    f12 = int(in_features * 1 / 2)
    f14 = int(in_features * 1 / 4)
    enc = [(in_features, in_features), (in_features, f34), (f34, f12),
           (f12, f14), (f14, latent)]
    dec = [(latent, f14), (f14, f12), (f12, f34), (f34, in_features),
           (in_features, in_features)]
    return enc + dec


def _round_up(x, m):
    return ((x + m - 1) // m) * m


def _device_kind():
    try:
        return jax.devices()[0].device_kind.lower()
    except Exception:
        return ""


def _vmem_capacity_bytes():
    try:
        return int(pltpu.get_tpu_info().vmem_capacity_bytes)
    except Exception:
        return 64 << 20    # conservative (v7x-sized) fallback


# ----------------------------------------------------------------------------
# Parameter preparation (host side, runs once)
# ----------------------------------------------------------------------------
def fold_layers(weights, biases, relu_flags):
    """Fold consecutive Linear layers with no ReLU between them, in f32.

    (x @ W0 + b0) @ W1 + b1 == x @ (W0 @ W1) + (b0 @ W1 + b1)
    """
    fw, fb, ff = [], [], []
    w_acc = b_acc = None
    for w, b, r in zip(weights, biases, relu_flags):
        w = w.astype(jnp.float32)
        b = b.astype(jnp.float32)
        if w_acc is None:
            w_acc, b_acc = w, b
        else:
            b_acc = b_acc @ w + b
            w_acc = w_acc @ w
        if r:                                   # ReLU forces a layer boundary
            fw.append(w_acc)
            fb.append(b_acc)
            ff.append(True)
            w_acc = b_acc = None
    if w_acc is not None:
        fw.append(w_acc)
        fb.append(b_acc)
        ff.append(False)
    return fw, fb, tuple(ff)


def prepare_params(weights, biases, relu_flags=RELU_FLAGS, *, fold=True,
                   param_dtype=jnp.bfloat16):
    """Optionally fold no-ReLU pairs (in f32), then zero-pad every layer to a
    common (P, P) and stack into a single packed weight / bias array.

    Zero padding keeps the padded lanes exactly zero through matmul, bias and
    ReLU, so the real output columns are unchanged.
    """
    assert len(weights) == len(biases) == len(relu_flags)
    if fold:
        weights, biases, relu_flags = fold_layers(weights, biases, relu_flags)

    max_dim = max(max(w.shape) for w in weights)
    p = _round_up(max_dim, LANE)
    n_layers = len(weights)

    w_packed = jnp.zeros((n_layers, p, p), param_dtype)
    b_packed = jnp.zeros((n_layers, 1, p), jnp.float32)
    for i, (w, b) in enumerate(zip(weights, biases)):
        d_in, d_out = w.shape
        w_packed = w_packed.at[i, :d_in, :d_out].set(w.astype(param_dtype))
        b_packed = b_packed.at[i, 0, :d_out].set(b.astype(jnp.float32))
    return w_packed, b_packed, tuple(relu_flags)


# ----------------------------------------------------------------------------
# Kernel
# ----------------------------------------------------------------------------
def _ae_kernel(relu_flags, d_in0, x_ref, w_ref, b_ref, o_ref):
    """One batch tile: whole (padded) Linear/ReLU chain runs in VMEM.

    x_ref : (tile_b, d_in0)  bf16   -- real (unpadded) feature width
    w_ref : (L, P, P)        bf16   -- packed, zero-padded weights
    b_ref : (L, 1, P)        f32    -- packed, zero-padded biases
    o_ref : (tile_b, P)      f32
    """
    n_layers = len(relu_flags)
    h = x_ref[...]                                  # bf16 (tile_b, d_in0)
    acc = None
    for i in range(n_layers):                       # static unroll
        w = w_ref[i]                                # (P, P) bf16
        if i == 0 and d_in0 != w.shape[0]:
            w = w[:d_in0, :]                        # (d_in0, P) — implicit pad
        # MXU matmul, f32 accumulation; bias add / ReLU on VPU in f32.
        acc = jnp.dot(h, w, preferred_element_type=jnp.float32) + b_ref[i]
        if relu_flags[i]:
            acc = jnp.maximum(acc, 0.0)
        if i + 1 < n_layers:
            h = acc.astype(jnp.bfloat16)            # bf16 operand for next MXU pass
    o_ref[...] = acc.astype(o_ref.dtype)


# ----------------------------------------------------------------------------
# Wrapper
# ----------------------------------------------------------------------------
def autoencoder_forward(x, w_packed, b_packed, relu_flags, *, max_tile_b=512):
    """x: (B, in_features).  w_packed/b_packed/relu_flags from prepare_params."""
    B, feat = x.shape
    n_layers, p_in, p_out = w_packed.shape

    kind = _device_kind()
    is_v7 = "v7" in kind
    min_tiles = 2 if is_v7 else 1                  # keep both v7x TCs busy

    # Batch tiling: round batch to the sublane (8), not to tile_b, so padded
    # waste is at most 7 rows (plus tile alignment for multi-tile grids).
    b8 = _round_up(B, SUBLANE)
    num_tiles = max(min_tiles, pl.cdiv(b8, max_tile_b))
    if is_v7 and num_tiles % 2:
        num_tiles += 1
    b_pad = _round_up(B, num_tiles * SUBLANE)
    tile_b = b_pad // num_tiles

    # bf16 input, real feature width — no host-side zero-pad copy of x.
    xb = x.astype(jnp.bfloat16)
    if b_pad != B:
        xb = jnp.pad(xb, ((0, b_pad - B), (0, 0)))

    grid = (num_tiles,)
    in_specs = [
        pl.BlockSpec((tile_b, feat), lambda i: (i, 0)),            # activations
        pl.BlockSpec((n_layers, p_in, p_out), lambda i: (0, 0, 0)),  # weights (resident)
        pl.BlockSpec((n_layers, 1, p_out), lambda i: (0, 0, 0)),     # biases (resident)
    ]
    out_specs = pl.BlockSpec((tile_b, p_out), lambda i: (i, 0))

    # Advisory cost estimate for XLA scheduling.
    param_bytes = (w_packed.size * w_packed.dtype.itemsize
                   + b_packed.size * b_packed.dtype.itemsize)
    flops = 2 * b_pad * n_layers * p_in * p_out
    bytes_accessed = (xb.size * xb.dtype.itemsize
                      + b_pad * p_out * 4 + param_bytes)
    cost = pl.CostEstimate(flops=flops, transcendentals=0,
                           bytes_accessed=bytes_accessed)

    # VMEM budget: resident params + double-buffered activation tiles + margin,
    # clamped against the chip's physical capacity (64 MiB on v7x).
    act_bytes = 2 * tile_b * (feat * 2 + p_out * 4)   # bf16 in + f32 out, x2 buf
    needed = param_bytes + act_bytes + (8 << 20)
    vmem_limit = int(min(max(needed, 32 << 20),
                         _vmem_capacity_bytes() * 3 // 4))

    kernel = functools.partial(_ae_kernel, tuple(relu_flags), feat)

    def _run(dim_sem):
        return pl.pallas_call(
            kernel,
            out_shape=jax.ShapeDtypeStruct((b_pad, p_out), jnp.float32),
            grid=grid,
            in_specs=in_specs,
            out_specs=out_specs,
            compiler_params=pltpu.CompilerParams(
                dimension_semantics=dim_sem,
                vmem_limit_bytes=vmem_limit),
            cost_estimate=cost,
        )(xb, w_packed, b_packed)

    if is_v7:
        # Only CORE_PARALLEL actually distributes grid steps across the two
        # v7x TensorCores; fall back to plain parallel if unsupported.
        try:
            out_p = _run((pltpu.CORE_PARALLEL,))
        except Exception:
            out_p = _run(("parallel",))
    else:
        out_p = _run(("parallel",))

    return out_p[:B, :feat]


# ----------------------------------------------------------------------------
# Init + reference
# ----------------------------------------------------------------------------
def init_params(key, in_features, latent):
    """Deterministic init mimicking nn.Linear's U(-1/sqrt(fan_in), +).
    Weights are stored (in_dim, out_dim) = transpose of nn.Linear.weight."""
    dims = layer_dims(in_features, latent)
    weights, biases = [], []
    for (d_in, d_out) in dims:
        key, kw, kb = jax.random.split(key, 3)
        bound = 1.0 / math.sqrt(d_in)
        weights.append(jax.random.uniform(kw, (d_in, d_out), jnp.float32,
                                          -bound, bound))
        biases.append(jax.random.uniform(kb, (d_out,), jnp.float32,
                                         -bound, bound))
    return weights, biases


def reference_forward(x, w_packed, b_packed, relu_flags):
    """Pure-JAX reference with numerics identical to the kernel (same packed
    folded params, same bf16 matmul operands, f32 accumulation)."""
    B, feat = x.shape
    n_layers = w_packed.shape[0]
    h = x.astype(jnp.bfloat16)
    acc = None
    for i in range(n_layers):
        w = w_packed[i]
        if i == 0:
            w = w[:feat, :]
        acc = jnp.dot(h, w, preferred_element_type=jnp.float32) + b_packed[i]
        if relu_flags[i]:
            acc = jnp.maximum(acc, 0.0)
        if i + 1 < n_layers:
            h = acc.astype(jnp.bfloat16)
    return acc[:, :feat]


if __name__ == "__main__":
    in_features = 64   # hidden dims 48, 32, 16, latent 8 — all lane-padded to 128
    latent = 8
    batch = 512        # module's default batch_size

    key = jax.random.PRNGKey(0)
    key, kx = jax.random.split(key)
    x = jax.random.normal(kx, (batch, in_features), jnp.float32)

    weights, biases = init_params(key, in_features, latent)
    # Fold no-ReLU pairs in f32 (10 -> 7 layers), pack into single arrays.
    w_packed, b_packed, flags = prepare_params(weights, biases, RELU_FLAGS,
                                               fold=True)

    out = autoencoder_forward(x, w_packed, b_packed, flags)
    out = jax.block_until_ready(out)

    ref = reference_forward(x, w_packed, b_packed, flags)
    assert out.shape == (batch, in_features)
    max_err = float(jnp.max(jnp.abs(out - ref)))
    assert jnp.allclose(out, ref, atol=2e-3, rtol=2e-3), max_err

    # TODO(synk): training loop (fit/Adam/MSELoss) is host-side logic, not a kernel.
    print("KERNEL_OK")
</pallas_src>

<mosaic_0001>
module attributes {stable_mosaic.version = 11 : i64} {
  func.func @_ae_kernel(%arg0: i32, %arg1: memref<512x64xbf16, #tpu.memory_space<vmem>>, %arg2: memref<7x128x128xbf16, #tpu.memory_space<vmem>>, %arg3: memref<7x1x128xf32, #tpu.memory_space<vmem>>, %arg4: memref<512x128xf32, #tpu.memory_space<vmem>>) attributes {dimension_semantics = [#tpu.dimension_semantics<parallel>], iteration_bounds = array<i64: 1>, scalar_prefetch = 0 : i64, scratch_operands = 0 : i64, tpu.core_type = #tpu.core_type<tc>, window_params = [{transform_indices = @transform_0, window_bounds = array<i64: 512, 64>}, {pipeline_mode = #tpu.pipeline_mode<synchronous>, transform_indices = @transform_1, window_bounds = array<i64: 7, 128, 128>}, {pipeline_mode = #tpu.pipeline_mode<synchronous>, transform_indices = @transform_2, window_bounds = array<i64: 7, 1, 128>}, {transform_indices = @transform_3, window_bounds = array<i64: 512, 128>}]} {
    %c0 = arith.constant 0 : index
    %c0_0 = arith.constant 0 : index
    %0 = vector.load %arg1[%c0, %c0_0] : memref<512x64xbf16, #tpu.memory_space<vmem>>, vector<512x64xbf16>
    %c0_1 = arith.constant 0 : index
    %c0_2 = arith.constant 0 : index
    %c0_3 = arith.constant 0 : index
    %1 = vector.load %arg2[%c0_1, %c0_2, %c0_3] : memref<7x128x128xbf16, #tpu.memory_space<vmem>>, vector<1x128x128xbf16>
    %2 = vector.shape_cast %1 : vector<1x128x128xbf16> to vector<128x128xbf16>
    %3 = vector.extract_strided_slice %2 {offsets = [0, 0], sizes = [64, 128], strides = [1, 1]} : vector<128x128xbf16> to vector<64x128xbf16>
    %cst = arith.constant dense<0.000000e+00> : vector<512x128xf32>
    %4 = tpu.matmul %0, %3, %cst {dimension_numbers = #tpu.dot_dimension_numbers<[1], [0], [0], [1], [0, 0, 1, 1], [], []>} : vector<512x64xbf16>, vector<64x128xbf16>, vector<512x128xf32> -> vector<512x128xf32>
    %c0_4 = arith.constant 0 : index
    %c0_5 = arith.constant 0 : index
    %c0_6 = arith.constant 0 : index
    %5 = vector.load %arg3[%c0_4, %c0_5, %c0_6] : memref<7x1x128xf32, #tpu.memory_space<vmem>>, vector<1x1x128xf32>
    %6 = vector.shape_cast %5 : vector<1x1x128xf32> to vector<1x128xf32>
    %7 = vector.broadcast %6 : vector<1x128xf32> to vector<512x128xf32>
    %8 = arith.addf %4, %7 : vector<512x128xf32>
    %cst_7 = arith.constant 0.000000e+00 : f32
    %9 = vector.broadcast %cst_7 : f32 to vector<512x128xf32>
    %10 = arith.maximumf %8, %9 : vector<512x128xf32>
    %11 = arith.truncf %10 : vector<512x128xf32> to vector<512x128xbf16>
    %c1 = arith.constant 1 : index
    %c0_8 = arith.constant 0 : index
    %c0_9 = arith.constant 0 : index
    %12 = vector.load %arg2[%c1, %c0_8, %c0_9] : memref<7x128x128xbf16, #tpu.memory_space<vmem>>, vector<1x128x128xbf16>
    %13 = vector.shape_cast %12 : vector<1x128x128xbf16> to vector<128x128xbf16>
    %cst_10 = arith.constant dense<0.000000e+00> : vector<512x128xf32>
    %14 = tpu.matmul %11, %13, %cst_10 {dimension_numbers = #tpu.dot_dimension_numbers<[1], [0], [0], [1], [0, 0, 1, 1], [], []>} : vector<512x128xbf16>, vector<128x128xbf16>, vector<512x128xf32> -> vector<512x128xf32>
    %c1_11 = arith.constant 1 : index
    %c0_12 = arith.constant 0 : index
    %c0_13 = arith.constant 0 : index
    %15 = vector.load %arg3[%c1_11, %c0_12, %c0_13] : memref<7x1x128xf32, #tpu.memory_space<vmem>>, vector<1x1x128xf32>
    %16 = vector.shape_cast %15 : vector<1x1x128xf32> to vector<1x128xf32>
    %17 = vector.broadcast %16 : vector<1x128xf32> to vector<512x128xf32>
    %18 = arith.addf %14, %17 : vector<512x128xf32>
    %cst_14 = arith.constant 0.000000e+00 : f32
    %19 = vector.broadcast %cst_14 : f32 to vector<512x128xf32>
    %20 = arith.maximumf %18, %19 : vector<512x128xf32>
    %21 = arith.truncf %20 : vector<512x128xf32> to vector<512x128xbf16>
    %c2 = arith.constant 2 : index
    %c0_15 = arith.constant 0 : index
    %c0_16 = arith.constant 0 : index
    %22 = vector.load %arg2[%c2, %c0_15, %c0_16] : memref<7x128x128xbf16, #tpu.memory_space<vmem>>, vector<1x128x128xbf16>
    %23 = vector.shape_cast %22 : vector<1x128x128xbf16> to vector<128x128xbf16>
    %cst_17 = arith.constant dense<0.000000e+00> : vector<512x128xf32>
    %24 = tpu.matmul %21, %23, %cst_17 {dimension_numbers = #tpu.dot_dimension_numbers<[1], [0], [0], [1], [0, 0, 1, 1], [], []>} : vector<512x128xbf16>, vector<128x128xbf16>, vector<512x128xf32> -> vector<512x128xf32>
    %c2_18 = arith.constant 2 : index
    %c0_19 = arith.constant 0 : index
    %c0_20 = arith.constant 0 : index
    %25 = vector.load %arg3[%c2_18, %c0_19, %c0_20] : memref<7x1x128xf32, #tpu.memory_space<vmem>>, vector<1x1x128xf32>
    %26 = vector.shape_cast %25 : vector<1x1x128xf32> to vector<1x128xf32>
    %27 = vector.broadcast %26 : vector<1x128xf32> to vector<512x128xf32>
    %28 = arith.addf %24, %27 : vector<512x128xf32>
    %cst_21 = arith.constant 0.000000e+00 : f32
    %29 = vector.broadcast %cst_21 : f32 to vector<512x128xf32>
    %30 = arith.maximumf %28, %29 : vector<512x128xf32>
    %31 = arith.truncf %30 : vector<512x128xf32> to vector<512x128xbf16>
    %c3 = arith.constant 3 : index
    %c0_22 = arith.constant 0 : index
    %c0_23 = arith.constant 0 : index
    %32 = vector.load %arg2[%c3, %c0_22, %c0_23] : memref<7x128x128xbf16, #tpu.memory_space<vmem>>, vector<1x128x128xbf16>
    %33 = vector.shape_cast %32 : vector<1x128x128xbf16> to vector<128x128xbf16>
    %cst_24 = arith.constant dense<0.000000e+00> : vector<512x128xf32>
    %34 = tpu.matmul %31, %33, %cst_24 {dimension_numbers = #tpu.dot_dimension_numbers<[1], [0], [0], [1], [0, 0, 1, 1], [], []>} : vector<512x128xbf16>, vector<128x128xbf16>, vector<512x128xf32> -> vector<512x128xf32>
    %c3_25 = arith.constant 3 : index
    %c0_26 = arith.constant 0 : index
    %c0_27 = arith.constant 0 : index
    %35 = vector.load %arg3[%c3_25, %c0_26, %c0_27] : memref<7x1x128xf32, #tpu.memory_space<vmem>>, vector<1x1x128xf32>
    %36 = vector.shape_cast %35 : vector<1x1x128xf32> to vector<1x128xf32>
    %37 = vector.broadcast %36 : vector<1x128xf32> to vector<512x128xf32>
    %38 = arith.addf %34, %37 : vector<512x128xf32>
    %cst_28 = arith.constant 0.000000e+00 : f32
    %39 = vector.broadcast %cst_28 : f32 to vector<512x128xf32>
    %40 = arith.maximumf %38, %39 : vector<512x128xf32>
    %41 = arith.truncf %40 : vector<512x128xf32> to vector<512x128xbf16>
    %c4 = arith.constant 4 : index
    %c0_29 = arith.constant 0 : index
    %c0_30 = arith.constant 0 : index
    %42 = vector.load %arg2[%c4, %c0_29, %c0_30] : memref<7x128x128xbf16, #tpu.memory_space<vmem>>, vector<1x128x128xbf16>
    %43 = vector.shape_cast %42 : vector<1x128x128xbf16> to vector<128x128xbf16>
    %cst_31 = arith.constant dense<0.000000e+00> : vector<512x128xf32>
    %44 = tpu.matmul %41, %43, %cst_31 {dimension_numbers = #tpu.dot_dimension_numbers<[1], [0], [0], [1], [0, 0, 1, 1], [], []>} : vector<512x128xbf16>, vector<128x128xbf16>, vector<512x128xf32> -> vector<512x128xf32>
    %c4_32 = arith.constant 4 : index
    %c0_33 = arith.constant 0 : index
    %c0_34 = arith.constant 0 : index
    %45 = vector.load %arg3[%c4_32, %c0_33, %c0_34] : memref<7x1x128xf32, #tpu.memory_space<vmem>>, vector<1x1x128xf32>
    %46 = vector.shape_cast %45 : vector<1x1x128xf32> to vector<1x128xf32>
    %47 = vector.broadcast %46 : vector<1x128xf32> to vector<512x128xf32>
    %48 = arith.addf %44, %47 : vector<512x128xf32>
    %cst_35 = arith.constant 0.000000e+00 : f32
    %49 = vector.broadcast %cst_35 : f32 to vector<512x128xf32>
    %50 = arith.maximumf %48, %49 : vector<512x128xf32>
    %51 = arith.truncf %50 : vector<512x128xf32> to vector<512x128xbf16>
    %c5 = arith.constant 5 : index
    %c0_36 = arith.constant 0 : index
    %c0_37 = arith.constant 0 : index
    %52 = vector.load %arg2[%c5, %c0_36, %c0_37] : memref<7x128x128xbf16, #tpu.memory_space<vmem>>, vector<1x128x128xbf16>
    %53 = vector.shape_cast %52 : vector<1x128x128xbf16> to vector<128x128xbf16>
    %cst_38 = arith.constant dense<0.000000e+00> : vector<512x128xf32>
    %54 = tpu.matmul %51, %53, %cst_38 {dimension_numbers = #tpu.dot_dimension_numbers<[1], [0], [0], [1], [0, 0, 1, 1], [], []>} : vector<512x128xbf16>, vector<128x128xbf16>, vector<512x128xf32> -> vector<512x128xf32>
    %c5_39 = arith.constant 5 : index
    %c0_40 = arith.constant 0 : index
    %c0_41 = arith.constant 0 : index
    %55 = vector.load %arg3[%c5_39, %c0_40, %c0_41] : memref<7x1x128xf32, #tpu.memory_space<vmem>>, vector<1x1x128xf32>
    %56 = vector.shape_cast %55 : vector<1x1x128xf32> to vector<1x128xf32>
    %57 = vector.broadcast %56 : vector<1x128xf32> to vector<512x128xf32>
    %58 = arith.addf %54, %57 : vector<512x128xf32>
    %cst_42 = arith.constant 0.000000e+00 : f32
    %59 = vector.broadcast %cst_42 : f32 to vector<512x128xf32>
    %60 = arith.maximumf %58, %59 : vector<512x128xf32>
    %61 = arith.truncf %60 : vector<512x128xf32> to vector<512x128xbf16>
    %c6 = arith.constant 6 : index
    %c0_43 = arith.constant 0 : index
    %c0_44 = arith.constant 0 : index
    %62 = vector.load %arg2[%c6, %c0_43, %c0_44] : memref<7x128x128xbf16, #tpu.memory_space<vmem>>, vector<1x128x128xbf16>
    %63 = vector.shape_cast %62 : vector<1x128x128xbf16> to vector<128x128xbf16>
    %cst_45 = arith.constant dense<0.000000e+00> : vector<512x128xf32>
    %64 = tpu.matmul %61, %63, %cst_45 {dimension_numbers = #tpu.dot_dimension_numbers<[1], [0], [0], [1], [0, 0, 1, 1], [], []>} : vector<512x128xbf16>, vector<128x128xbf16>, vector<512x128xf32> -> vector<512x128xf32>
    %c6_46 = arith.constant 6 : index
    %c0_47 = arith.constant 0 : index
    %c0_48 = arith.constant 0 : index
    %65 = vector.load %arg3[%c6_46, %c0_47, %c0_48] : memref<7x1x128xf32, #tpu.memory_space<vmem>>, vector<1x1x128xf32>
    %66 = vector.shape_cast %65 : vector<1x1x128xf32> to vector<1x128xf32>
    %67 = vector.broadcast %66 : vector<1x128xf32> to vector<512x128xf32>
    %68 = arith.addf %64, %67 : vector<512x128xf32>
    %c0_49 = arith.constant 0 : index
    %c0_50 = arith.constant 0 : index
    %69 = vector.load %arg4[%c0_49, %c0_50] : memref<512x128xf32, #tpu.memory_space<vmem>>, vector<512x128xf32>
    tpu.vector_store %arg4[%c0_49, %c0_50], %68 {strides = array<i32>} : memref<512x128xf32, #tpu.memory_space<vmem>>, vector<512x128xf32>,
    return
  }
  func.func @transform_0(%arg0: i32) -> (i32, i32) {
    %c0_i32 = arith.constant 0 : i32
    %c0_i32_0 = arith.constant 0 : i32
    return %arg0, %c0_i32 : i32, i32
  }
  func.func @transform_1(%arg0: i32) -> (i32, i32, i32) {
    %c0_i32 = arith.constant 0 : i32
    %c0_i32_0 = arith.constant 0 : i32
    %c0_i32_1 = arith.constant 0 : i32
    %c0_i32_2 = arith.constant 0 : i32
    return %c0_i32, %c0_i32_0, %c0_i32_1 : i32, i32, i32
  }
  func.func @transform_2(%arg0: i32) -> (i32, i32, i32) {
    %c0_i32 = arith.constant 0 : i32
    %c0_i32_0 = arith.constant 0 : i32
    %c0_i32_1 = arith.constant 0 : i32
    %c0_i32_2 = arith.constant 0 : i32
    return %c0_i32, %c0_i32_0, %c0_i32_1 : i32, i32, i32
  }
  func.func @transform_3(%arg0: i32) -> (i32, i32) {
    %c0_i32 = arith.constant 0 : i32
    %c0_i32_0 = arith.constant 0 : i32
    return %arg0, %c0_i32 : i32, i32
  }
}

</mosaic_0001>

<llo_original>
// kernel: tpu_custom_call.1
$region0: #{tpu_custom_call.1}
  #allocation0 [shape = 'u32[]', space=smem, size = 0x4, offset = 0x4, fixed_abs, tag = 'smem constant byte address 0x4 - core index']
  #allocation1 [shape = 'u32[72,128]{1,0:T(1,128)}', space=vmem, size = 0x9000, scoped, tag = 'internal scratch']
  %s0 = inlined_call_operand.vmem [shape: bf16[512,64], index: 0, kind: input, shape index: {}]
  %s1 = inlined_call_operand.hbm [shape: bf16[7,128,128], index: 1, kind: input, shape index: {}]
  %s2 = inlined_call_operand.vmem [shape: f32[7,1,128], index: 2, kind: input, shape index: {}]
  %s3 = inlined_call_operand.hbm [shape: f32[512,128], index: 3, kind: output, shape index: {}]
  %s4 = sld [smem:[#allocation0]]
  $region26: #{tpu_custom_call.1} parent=0
    _
  %s6 = ssub.s32 1, %s4
  %s7 = scalar_select 0, %s6, %s4
  $region1: #{tpu_custom_call.1} parent=0
    #allocation2 [shape = 'u8[229376]{0}', space=vmem, size = 0x38000, scoped, tag = 'input window, operand 1, single buffered']
    #allocation3 [shape = 's32[1]{0}', space=sflag, size = 0x4, scoped, tag = 'scoped memory for tpu_custom_call.1']
    #allocation4 [shape = 's32[1]{0}', space=sflag, size = 0x4, scoped, tag = 'scoped memory for tpu_custom_call.1']
    #allocation5 [shape = 'u8[262144]{0}', space=vmem, size = 0x40000, scoped, tag = 'output window, operand 0, single buffered']
    %8 = vsyncpa [#allocation3], 0
    %9 = vsyncpa [#allocation4], 0
    // Predicated region
    $region2: #{tpu_custom_call.1} parent=1 // pred_check
      _
    $region3: #{tpu_custom_call.1} parent=1 // pred_check_branch
      %11 = sbr.rel (0) target = $region5
    $region4: #{tpu_custom_call.1} parent=1 // pred_region
      _
    $region5: #{tpu_custom_call.1} parent=1 // pred_fallthru
      _
    // Predicated region
    $region6: #{tpu_custom_call.1} parent=1 // pred_check
      _
    $region7: #{tpu_custom_call.1} parent=1 // pred_check_branch
      %13 = sbr.rel (0) target = $region9
    $region8: #{tpu_custom_call.1} parent=1 // pred_region
      %15 = vsyncadd [#allocation3], 0
      %s16 = sshll.u32 %s1, 4
      %s17 = int_to_ptr.hbm [resolvable:$true] %s16
      %s18 = sshll.u32 [#allocation2], 4
      %s19 = int_to_ptr.vmem [resolvable:$true] %s18
      %24 = dma.hbm_to_vmem [thread:$0]  %s17, 7168, %s19, [#allocation3], 64, 64, 4
    $region9: #{tpu_custom_call.1} parent=1 // pred_fallthru
      _
    // Predicated region
    $region10: #{tpu_custom_call.1} parent=1 // pred_check
      _
    $region11: #{tpu_custom_call.1} parent=1 // pred_check_branch
      %26 = sbr.rel (0) target = $region13
    $region12: #{tpu_custom_call.1} parent=1 // pred_region
      _
    $region13: #{tpu_custom_call.1} parent=1 // pred_fallthru
      _
    // Predicated region
    $region14: #{tpu_custom_call.1} parent=1 // pred_check
      _
    $region15: #{tpu_custom_call.1} parent=1 // pred_check_branch
      %28 = sbr.rel (0) target = $region17
    $region16: #{tpu_custom_call.1} parent=1 // pred_region
      %30 = dma.done [#allocation3], 7168
    $region17: #{tpu_custom_call.1} parent=1 // pred_fallthru
      _
    %v32 = vld [vmem:[%s0] sm:$0xf]
    %v33 = vld [vmem:[%s0 + $0x4] sm:$0xf]
    %v34 = vld [vmem:[%s0 + $0x8] sm:$0xf]
    %v35 = vld [vmem:[%s0 + $0xc] sm:$0xf]
    %v36 = vld [vmem:[%s0 + $0x10] sm:$0xf]
    %v37 = vld [vmem:[%s0 + $0x14] sm:$0xf]
    %v38 = vld [vmem:[%s0 + $0x18] sm:$0xf]
    %v39 = vld [vmem:[%s0 + $0x1c] sm:$0xf]
    %v40 = vld [vmem:[%s0 + $0x20] sm:$0xf]
    %v41 = vld [vmem:[%s0 + $0x24] sm:$0xf]
    %v42 = vld [vmem:[%s0 + $0x28] sm:$0xf]
    %v43 = vld [vmem:[%s0 + $0x2c] sm:$0xf]
    %v44 = vld [vmem:[%s0 + $0x30] sm:$0xf]
    %v45 = vld [vmem:[%s0 + $0x34] sm:$0xf]
    %v46 = vld [vmem:[%s0 + $0x38] sm:$0xf]
    %v47 = vld [vmem:[%s0 + $0x3c] sm:$0xf]
    %v48 = vld [vmem:[%s0 + $0x40] sm:$0xf]
    %v49 = vld [vmem:[%s0 + $0x44] sm:$0xf]
    %v50 = vld [vmem:[%s0 + $0x48] sm:$0xf]
    %v51 = vld [vmem:[%s0 + $0x4c] sm:$0xf]
    %v52 = vld [vmem:[%s0 + $0x50] sm:$0xf]
    %v53 = vld [vmem:[%s0 + $0x54] sm:$0xf]
    %v54 = vld [vmem:[%s0 + $0x58] sm:$0xf]
    %v55 = vld [vmem:[%s0 + $0x5c] sm:$0xf]
    %v56 = vld [vmem:[%s0 + $0x60] sm:$0xf]
    %v57 = vld [vmem:[%s0 + $0x64] sm:$0xf]
    %v58 = vld [vmem:[%s0 + $0x68] sm:$0xf]
    %v59 = vld [vmem:[%s0 + $0x6c] sm:$0xf]
    %v60 = vld [vmem:[%s0 + $0x70] sm:$0xf]
    %v61 = vld [vmem:[%s0 + $0x74] sm:$0xf]
    %v62 = vld [vmem:[%s0 + $0x78] sm:$0xf]
    %v63 = vld [vmem:[%s0 + $0x7c] sm:$0xf]
    %v64 = vld [vmem:[%s0 + $0x80] sm:$0xf]
    %v65 = vld [vmem:[%s0 + $0x84] sm:$0xf]
    %v66 = vld [vmem:[%s0 + $0x88] sm:$0xf]
    %v67 = vld [vmem:[%s0 + $0x8c] sm:$0xf]
    %v68 = vld [vmem:[%s0 + $0x90] sm:$0xf]
    %v69 = vld [vmem:[%s0 + $0x94] sm:$0xf]
    %v70 = vld [vmem:[%s0 + $0x98] sm:$0xf]
    %v71 = vld [vmem:[%s0 + $0x9c] sm:$0xf]
    %v72 = vld [vmem:[%s0 + $0xa0] sm:$0xf]
    %v73 = vld [vmem:[%s0 + $0xa4] sm:$0xf]
    %v74 = vld [vmem:[%s0 + $0xa8] sm:$0xf]
    %v75 = vld [vmem:[%s0 + $0xac] sm:$0xf]
    %v76 = vld [vmem:[%s0 + $0xb0] sm:$0xf]
    %v77 = vld [vmem:[%s0 + $0xb4] sm:$0xf]
    %v78 = vld [vmem:[%s0 + $0xb8] sm:$0xf]
    %v79 = vld [vmem:[%s0 + $0xbc] sm:$0xf]
    %v80 = vld [vmem:[%s0 + $0xc0] sm:$0xf]
    %v81 = vld [vmem:[%s0 + $0xc4] sm:$0xf]
    %v82 = vld [vmem:[%s0 + $0xc8] sm:$0xf]
    %v83 = vld [vmem:[%s0 + $0xcc] sm:$0xf]
    %v84 = vld [vmem:[%s0 + $0xd0] sm:$0xf]
    %v85 = vld [vmem:[%s0 + $0xd4] sm:$0xf]
    %v86 = vld [vmem:[%s0 + $0xd8] sm:$0xf]
    %v87 = vld [vmem:[%s0 + $0xdc] sm:$0xf]
    %v88 = vld [vmem:[%s0 + $0xe0] sm:$0xf]
    %v89 = vld [vmem:[%s0 + $0xe4] sm:$0xf]
    %v90 = vld [vmem:[%s0 + $0xe8] sm:$0xf]
    %v91 = vld [vmem:[%s0 + $0xec] sm:$0xf]
    %v92 = vld [vmem:[%s0 + $0xf0] sm:$0xf]
    %v93 = vld [vmem:[%s0 + $0xf4] sm:$0xf]
    %v94 = vld [vmem:[%s0 + $0xf8] sm:$0xf]
    %v95 = vld [vmem:[%s0 + $0xfc] sm:$0xf]
    %v96 = vld [vmem:[#allocation2] sm:$0xf]
    %v97 = vld [vmem:[#allocation2 + $0x4] sm:$0xf]
    %v98 = vld [vmem:[#allocation2 + $0x8] sm:$0xf]
    %v99 = vld [vmem:[#allocation2 + $0xc] sm:$0xf]
    %v100 = vld [vmem:[#allocation2 + $0x10] sm:$0xf]
    %v101 = vld [vmem:[#allocation2 + $0x14] sm:$0xf]
    %v102 = vld [vmem:[#allocation2 + $0x18] sm:$0xf]
    %v103 = vld [vmem:[#allocation2 + $0x1c] sm:$0xf]
    %v104 = vld [vmem:[%s2] sm:$0x1]
    %v106 = vperm.slane %v104, 0
    %v172 = vunpack.c.l.b16 %v32
    %v173 = vunpack.c.l.b16 %v33
    %v174 = vunpack.c.l.b16 %v34
    %v175 = vunpack.c.l.b16 %v35
    %v176 = vunpack.c.l.b16 %v36
    %v177 = vunpack.c.l.b16 %v37
    %v178 = vunpack.c.l.b16 %v38
    %v179 = vunpack.c.l.b16 %v39
    %v180 = vunpack.c.l.b16 %v40
    %v181 = vunpack.c.l.b16 %v41
    %v182 = vunpack.c.l.b16 %v42
    %v183 = vunpack.c.l.b16 %v43
    %v184 = vunpack.c.l.b16 %v44
    %v185 = vunpack.c.l.b16 %v45
    %v186 = vunpack.c.l.b16 %v46
    %v187 = vunpack.c.l.b16 %v47
    %v188 = vunpack.c.l.b16 %v48
    %v189 = vunpack.c.l.b16 %v49
    %v190 = vunpack.c.l.b16 %v50
    %v191 = vunpack.c.l.b16 %v51
    %v192 = vunpack.c.l.b16 %v52
    %v193 = vunpack.c.l.b16 %v53
    %v194 = vunpack.c.l.b16 %v54
    %v195 = vunpack.c.l.b16 %v55
    %v196 = vunpack.c.l.b16 %v56
    %v197 = vunpack.c.l.b16 %v57
    %v198 = vunpack.c.l.b16 %v58
    %v199 = vunpack.c.l.b16 %v59
    %v200 = vunpack.c.l.b16 %v60
    %v201 = vunpack.c.l.b16 %v61
    %v202 = vunpack.c.l.b16 %v62
    %v203 = vunpack.c.l.b16 %v63
    %v204 = vunpack.c.l.b16 %v64
    %v205 = vunpack.c.l.b16 %v65
    %v206 = vunpack.c.l.b16 %v66
    %v207 = vunpack.c.l.b16 %v67
    %v208 = vunpack.c.l.b16 %v68
    %v209 = vunpack.c.l.b16 %v69
    %v210 = vunpack.c.l.b16 %v70
    %v211 = vunpack.c.l.b16 %v71
    %v212 = vunpack.c.l.b16 %v72
    %v213 = vunpack.c.l.b16 %v73
    %v214 = vunpack.c.l.b16 %v74
    %v215 = vunpack.c.l.b16 %v75
    %v216 = vunpack.c.l.b16 %v76
    %v217 = vunpack.c.l.b16 %v77
    %v218 = vunpack.c.l.b16 %v78
    %v219 = vunpack.c.l.b16 %v79
    %v220 = vunpack.c.l.b16 %v80
    %v221 = vunpack.c.l.b16 %v81
    %v222 = vunpack.c.l.b16 %v82
    %v223 = vunpack.c.l.b16 %v83
    %v224 = vunpack.c.l.b16 %v84
    %v225 = vunpack.c.l.b16 %v85
    %v226 = vunpack.c.l.b16 %v86
    %v227 = vunpack.c.l.b16 %v87
    %v228 = vunpack.c.l.b16 %v88
    %v229 = vunpack.c.l.b16 %v89
    %v230 = vunpack.c.l.b16 %v90
    %v231 = vunpack.c.l.b16 %v91
    %v232 = vunpack.c.l.b16 %v92
    %v233 = vunpack.c.l.b16 %v93
    %v234 = vunpack.c.l.b16 %v94
    %v235 = vunpack.c.l.b16 %v95
    %v236 = vpack.c.b16 %v173, %v172
    %v237 = vpack.c.b16 %v175, %v174
    %v238 = vpack.c.b16 %v177, %v176
    %v239 = vpack.c.b16 %v179, %v178
    %v240 = vpack.c.b16 %v181, %v180
    %v241 = vpack.c.b16 %v183, %v182
    %v242 = vpack.c.b16 %v185, %v184
    %v243 = vpack.c.b16 %v187, %v186
    %v244 = vpack.c.b16 %v189, %v188
    %v245 = vpack.c.b16 %v191, %v190
    %v246 = vpack.c.b16 %v193, %v192
    %v247 = vpack.c.b16 %v195, %v194
    %v248 = vpack.c.b16 %v197, %v196
    %v249 = vpack.c.b16 %v199, %v198
    %v250 = vpack.c.b16 %v201, %v200
    %v251 = vpack.c.b16 %v203, %v202
    %v252 = vpack.c.b16 %v205, %v204
    %v253 = vpack.c.b16 %v207, %v206
    %v254 = vpack.c.b16 %v209, %v208
    %v255 = vpack.c.b16 %v211, %v210
    %v256 = vpack.c.b16 %v213, %v212
    %v257 = vpack.c.b16 %v215, %v214
    %v258 = vpack.c.b16 %v217, %v216
    %v259 = vpack.c.b16 %v219, %v218
    %v260 = vpack.c.b16 %v221, %v220
    %v261 = vpack.c.b16 %v223, %v222
    %v262 = vpack.c.b16 %v225, %v224
    %v263 = vpack.c.b16 %v227, %v226
    %v264 = vpack.c.b16 %v229, %v228
    %v265 = vpack.c.b16 %v231, %v230
    %v266 = vpack.c.b16 %v233, %v232
    %v267 = vpack.c.b16 %v235, %v234
    %v276 = vunpack.c.l.b16 %v96
    %v277 = vunpack.c.l.b16 %v97
    %v278 = vunpack.c.l.b16 %v98
    %v279 = vunpack.c.l.b16 %v99
    %v280 = vunpack.c.l.b16 %v100
    %v281 = vunpack.c.l.b16 %v101
    %v282 = vunpack.c.l.b16 %v102
    %v283 = vunpack.c.l.b16 %v103
    %v284 = vpack.c.b16 %v277, %v276
    %v285 = vpack.c.b16 %v279, %v278
    %v286 = vpack.c.b16 %v281, %v280
    %v287 = vpack.c.b16 %v283, %v282
    %vm292 = vcmask 523264
    %v294 = vsel %vm292, %v236, 0
    %v297 = vsel %vm292, %v237, 0
    %v300 = vsel %vm292, %v238, 0
    %v303 = vsel %vm292, %v239, 0
    %v306 = vsel %vm292, %v240, 0
    %v309 = vsel %vm292, %v241, 0
    %v312 = vsel %vm292, %v242, 0
    %v315 = vsel %vm292, %v243, 0
    %v318 = vsel %vm292, %v244, 0
    %v321 = vsel %vm292, %v245, 0
    %v324 = vsel %vm292, %v246, 0
    %v327 = vsel %vm292, %v247, 0
    %v330 = vsel %vm292, %v248, 0
    %v333 = vsel %vm292, %v249, 0
    %v336 = vsel %vm292, %v250, 0
    %v339 = vsel %vm292, %v251, 0
    %v342 = vsel %vm292, %v252, 0
    %v345 = vsel %vm292, %v253, 0
    %v348 = vsel %vm292, %v254, 0
    %v351 = vsel %vm292, %v255, 0
    %v354 = vsel %vm292, %v256, 0
    %v357 = vsel %vm292, %v257, 0
    %v360 = vsel %vm292, %v258, 0
    %v363 = vsel %vm292, %v259, 0
    %v366 = vsel %vm292, %v260, 0
    %v369 = vsel %vm292, %v261, 0
    %v372 = vsel %vm292, %v262, 0
    %v375 = vsel %vm292, %v263, 0
    %v378 = vsel %vm292, %v264, 0
    %v381 = vsel %vm292, %v265, 0
    %v384 = vsel %vm292, %v266, 0
    %v387 = vsel %vm292, %v267, 0
    %389 = vmatpush.bf16.msra.mxu0 0
    %390 = vmatpush.bf16.msra.mxu0 0
    %391 = vmatpush.bf16.msra.mxu0 0
    %392 = vmatpush.bf16.msra.mxu0 0
    %393 = vmatpush.bf16.msra.mxu0 %v287
    %394 = vmatpush.bf16.msra.mxu0 %v286
    %395 = vmatpush.bf16.msra.mxu0 %v285
    %396 = vmatpush.bf16.msra.mxu0 %v284
    %397 = vmatmul.bf16.gmra.mxu0 %v294
    %v398 = vpop.f32.mrf.mxu0
    %v399 = vadd.f32 %v106, %v398
    %v400 = vpop.f32.mrf.mxu0
    %v401 = vadd.f32 %v106, %v400
    %402 = vmatmul.bf16.gmra.mxu0 %v297
    %v403 = vpop.f32.mrf.mxu0
    %v404 = vadd.f32 %v106, %v403
    %v405 = vpop.f32.mrf.mxu0
    %v406 = vadd.f32 %v106, %v405
    %407 = vmatmul.bf16.gmra.mxu0 %v300
    %v408 = vpop.f32.mrf.mxu0
    %v409 = vadd.f32 %v106, %v408
    %v410 = vpop.f32.mrf.mxu0
    %v411 = vadd.f32 %v106, %v410
    %412 = vmatmul.bf16.gmra.mxu0 %v303
    %v413 = vpop.f32.mrf.mxu0
    %v414 = vadd.f32 %v106, %v413
    %v415 = vpop.f32.mrf.mxu0
    %v416 = vadd.f32 %v106, %v415
    %417 = vmatmul.bf16.gmra.mxu0 %v306
    %v418 = vpop.f32.mrf.mxu0
    %v419 = vadd.f32 %v106, %v418
    %v420 = vpop.f32.mrf.mxu0
    %v421 = vadd.f32 %v106, %v420
    %422 = vmatmul.bf16.gmra.mxu0 %v309
    %v423 = vpop.f32.mrf.mxu0
    %v424 = vadd.f32 %v106, %v423
    %v425 = vpop.f32.mrf.mxu0
    %v426 = vadd.f32 %v106, %v425
    %427 = vmatmul.bf16.gmra.mxu0 %v312
    %v428 = vpop.f32.mrf.mxu0
    %v429 = vadd.f32 %v106, %v428
    %v430 = vpop.f32.mrf.mxu0
    %v431 = vadd.f32 %v106, %v430
    %432 = vmatmul.bf16.gmra.mxu0 %v315
    %v433 = vpop.f32.mrf.mxu0
    %v434 = vadd.f32 %v106, %v433
    %v435 = vpop.f32.mrf.mxu0
    %v436 = vadd.f32 %v106, %v435
    %437 = vmatmul.bf16.gmra.mxu0 %v318
    %v438 = vpop.f32.mrf.mxu0
    %v439 = vadd.f32 %v106, %v438
    %v440 = vpop.f32.mrf.mxu0
    %v441 = vadd.f32 %v106, %v440
    %442 = vmatmul.bf16.gmra.mxu0 %v321
    %v443 = vpop.f32.mrf.mxu0
    %v444 = vadd.f32 %v106, %v443
    %v445 = vpop.f32.mrf.mxu0
    %v446 = vadd.f32 %v106, %v445
    %447 = vmatmul.bf16.gmra.mxu0 %v324
    %v448 = vpop.f32.mrf.mxu0
    %v449 = vadd.f32 %v106, %v448
    %v450 = vpop.f32.mrf.mxu0
    %v451 = vadd.f32 %v106, %v450
    %452 = vmatmul.bf16.gmra.mxu0 %v327
    %v453 = vpop.f32.mrf.mxu0
    %v454 = vadd.f32 %v106, %v453
    %v455 = vpop.f32.mrf.mxu0
    %v456 = vadd.f32 %v106, %v455
    %457 = vmatmul.bf16.gmra.mxu0 %v330
    %v458 = vpop.f32.mrf.mxu0
    %v459 = vadd.f32 %v106, %v458
    %v460 = vpop.f32.mrf.mxu0
    %v461 = vadd.f32 %v106, %v460
    %462 = vmatmul.bf16.gmra.mxu0 %v333
    %v463 = vpop.f32.mrf.mxu0
    %v464 = vadd.f32 %v106, %v463
    %v465 = vpop.f32.mrf.mxu0
    %v466 = vadd.f32 %v106, %v465
    %467 = vmatmul.bf16.gmra.mxu0 %v336
    %v468 = vpop.f32.mrf.mxu0
    %v469 = vadd.f32 %v106, %v468
    %v470 = vpop.f32.mrf.mxu0
    %v471 = vadd.f32 %v106, %v470
    %472 = vmatmul.bf16.gmra.mxu0 %v339
    %v473 = vpop.f32.mrf.mxu0
    %v474 = vadd.f32 %v106, %v473
    %v475 = vpop.f32.mrf.mxu0
    %v476 = vadd.f32 %v106, %v475
    %477 = vmatmul.bf16.gmra.mxu0 %v342
    %v478 = vpop.f32.mrf.mxu0
    %v479 = vadd.f32 %v106, %v478
    %v480 = vpop.f32.mrf.mxu0
    %v481 = vadd.f32 %v106, %v480
    %482 = vmatmul.bf16.gmra.mxu0 %v345
    %v483 = vpop.f32.mrf.mxu0
    %v484 = vadd.f32 %v106, %v483
    %v485 = vpop.f32.mrf.mxu0
    %v486 = vadd.f32 %v106, %v485
    %487 = vmatmul.bf16.gmra.mxu0 %v348
    %v488 = vpop.f32.mrf.mxu0
    %v489 = vadd.f32 %v106, %v488
    %v490 = vpop.f32.mrf.mxu0
    %v491 = vadd.f32 %v106, %v490
    %492 = vmatmul.bf16.gmra.mxu0 %v351
    %v493 = vpop.f32.mrf.mxu0
    %v494 = vadd.f32 %v106, %v493
    %v495 = vpop.f32.mrf.mxu0
    %v496 = vadd.f32 %v106, %v495
    %497 = vmatmul.bf16.gmra.mxu0 %v354
    %v498 = vpop.f32.mrf.mxu0
    %v499 = vadd.f32 %v106, %v498
    %v500 = vpop.f32.mrf.mxu0
    %v501 = vadd.f32 %v106, %v500
    %502 = vmatmul.bf16.gmra.mxu0 %v357
    %v503 = vpop.f32.mrf.mxu0
    %v504 = vadd.f32 %v106, %v503
    %v505 = vpop.f32.mrf.mxu0
    %v506 = vadd.f32 %v106, %v505
    %507 = vmatmul.bf16.gmra.mxu0 %v360
    %v508 = vpop.f32.mrf.mxu0
    %v509 = vadd.f32 %v106, %v508
    %v510 = vpop.f32.mrf.mxu0
    %v511 = vadd.f32 %v106, %v510
    %512 = vmatmul.bf16.gmra.mxu0 %v363
    %v513 = vpop.f32.mrf.mxu0
    %v514 = vadd.f32 %v106, %v513
    %v515 = vpop.f32.mrf.mxu0
    %v516 = vadd.f32 %v106, %v515
    %517 = vmatmul.bf16.gmra.mxu0 %v366
    %v518 = vpop.f32.mrf.mxu0
    %v519 = vadd.f32 %v106, %v518
    %v520 = vpop.f32.mrf.mxu0
    %v521 = vadd.f32 %v106, %v520
    %522 = vmatmul.bf16.gmra.mxu0 %v369
    %v523 = vpop.f32.mrf.mxu0
    %v524 = vadd.f32 %v106, %v523
    %v525 = vpop.f32.mrf.mxu0
    %v526 = vadd.f32 %v106, %v525
    %527 = vmatmul.bf16.gmra.mxu0 %v372
    %v528 = vpop.f32.mrf.mxu0
    %v529 = vadd.f32 %v106, %v528
    %v530 = vpop.f32.mrf.mxu0
    %v531 = vadd.f32 %v106, %v530
    %532 = vmatmul.bf16.gmra.mxu0 %v375
    %v533 = vpop.f32.mrf.mxu0
    %v534 = vadd.f32 %v106, %v533
    %v535 = vpop.f32.mrf.mxu0
    %v536 = vadd.f32 %v106, %v535
    %537 = vmatmul.bf16.gmra.mxu0 %v378
    %v538 = vpop.f32.mrf.mxu0
    %v539 = vadd.f32 %v106, %v538
    %v540 = vpop.f32.mrf.mxu0
    %v541 = vadd.f32 %v106, %v540
    %542 = vmatmul.bf16.gmra.mxu0 %v381
    %v543 = vpop.f32.mrf.mxu0
    %v544 = vadd.f32 %v106, %v543
    %v545 = vpop.f32.mrf.mxu0
    %v546 = vadd.f32 %v106, %v545
    %547 = vmatmul.bf16.gmra.mxu0 %v384
    %v548 = vpop.f32.mrf.mxu0
    %v549 = vadd.f32 %v106, %v548
    %v550 = vpop.f32.mrf.mxu0
    %v551 = vadd.f32 %v106, %v550
    %552 = vmatmul.bf16.gmra.mxu0 %v387
    %v553 = vpop.f32.mrf.mxu0
    %v554 = vadd.f32 %v106, %v553
    %v555 = vpop.f32.mrf.mxu0
    %v556 = vadd.f32 %v106, %v555
    %557 = vdwg.mxu0
    %v558 = vmax.f32 %v399, 0.0
    %v559 = vmax.f32 %v401, 0.0
    %v560 = vmax.f32 %v404, 0.0
    %v561 = vmax.f32 %v406, 0.0
    %v562 = vmax.f32 %v409, 0.0
    %v563 = vmax.f32 %v411, 0.0
    %v564 = vmax.f32 %v414, 0.0
    %v565 = vmax.f32 %v416, 0.0
    %v566 = vmax.f32 %v419, 0.0
    %v567 = vmax.f32 %v421, 0.0
    %v568 = vmax.f32 %v424, 0.0
    %v569 = vmax.f32 %v426, 0.0
    %v570 = vmax.f32 %v429, 0.0
    %v571 = vmax.f32 %v431, 0.0
    %v572 = vmax.f32 %v434, 0.0
    %v573 = vmax.f32 %v436, 0.0
    %v574 = vmax.f32 %v439, 0.0
    %v575 = vmax.f32 %v441, 0.0
    %v576 = vmax.f32 %v444, 0.0
    %v577 = vmax.f32 %v446, 0.0
    %v578 = vmax.f32 %v449, 0.0
    %v579 = vmax.f32 %v451, 0.0
    %v580 = vmax.f32 %v454, 0.0
    %v581 = vmax.f32 %v456, 0.0
    %v582 = vmax.f32 %v459, 0.0
    %v583 = vmax.f32 %v461, 0.0
    %v584 = vmax.f32 %v464, 0.0
    %v585 = vmax.f32 %v466, 0.0
    %v586 = vmax.f32 %v469, 0.0
    %v587 = vmax.f32 %v471, 0.0
    %v588 = vmax.f32 %v474, 0.0
    %v589 = vmax.f32 %v476, 0.0
    %v590 = vmax.f32 %v479, 0.0
    %v591 = vmax.f32 %v481, 0.0
    %v592 = vmax.f32 %v484, 0.0
    %v593 = vmax.f32 %v486, 0.0
    %v594 = vmax.f32 %v489, 0.0
    %v595 = vmax.f32 %v491, 0.0
    %v596 = vmax.f32 %v494, 0.0
    %v597 = vmax.f32 %v496, 0.0
    %v598 = vmax.f32 %v499, 0.0
    %v599 = vmax.f32 %v501, 0.0
    %v600 = vmax.f32 %v504, 0.0
    %v601 = vmax.f32 %v506, 0.0
    %v602 = vmax.f32 %v509, 0.0
    %v603 = vmax.f32 %v511, 0.0
    %v604 = vmax.f32 %v514, 0.0
    %v605 = vmax.f32 %v516, 0.0
    %v606 = vmax.f32 %v519, 0.0
    %v607 = vmax.f32 %v521, 0.0
    %v608 = vmax.f32 %v524, 0.0
    %v609 = vmax.f32 %v526, 0.0
    %v610 = vmax.f32 %v529, 0.0
    %v611 = vmax.f32 %v531, 0.0
    %v612 = vmax.f32 %v534, 0.0
    %v613 = vmax.f32 %v536, 0.0
    %v614 = vmax.f32 %v539, 0.0
    %v615 = vmax.f32 %v541, 0.0
    %v616 = vmax.f32 %v544, 0.0
    %v617 = vmax.f32 %v546, 0.0
    %v618 = vmax.f32 %v549, 0.0
    %v619 = vmax.f32 %v551, 0.0
    %v620 = vmax.f32 %v554, 0.0
    %v621 = vmax.f32 %v556, 0.0
    %v622 = vpack.c.bf16 %v559, %v558
    %v623 = vpack.c.bf16 %v561, %v560
    %v624 = vpack.c.bf16 %v563, %v562
    %v625 = vpack.c.bf16 %v565, %v564
    %v626 = vpack.c.bf16 %v567, %v566
    %v627 = vpack.c.bf16 %v569, %v568
    %v628 = vpack.c.bf16 %v571, %v570
    %v629 = vpack.c.bf16 %v573, %v572
    %v630 = vpack.c.bf16 %v575, %v574
    %v631 = vpack.c.bf16 %v577, %v576
    %v632 = vpack.c.bf16 %v579, %v578
    %v633 = vpack.c.bf16 %v581, %v580
    %v634 = vpack.c.bf16 %v583, %v582
    %v635 = vpack.c.bf16 %v585, %v584
    %v636 = vpack.c.bf16 %v587, %v586
    %v637 = vpack.c.bf16 %v589, %v588
    %v638 = vpack.c.bf16 %v591, %v590
    %v639 = vpack.c.bf16 %v593, %v592
    %v640 = vpack.c.bf16 %v595, %v594
    %v641 = vpack.c.bf16 %v597, %v596
    %v642 = vpack.c.bf16 %v599, %v598
    %v643 = vpack.c.bf16 %v601, %v600
    %v644 = vpack.c.bf16 %v603, %v602
    %v645 = vpack.c.bf16 %v605, %v604
    %v646 = vpack.c.bf16 %v607, %v606
    %v647 = vpack.c.bf16 %v609, %v608
    %v648 = vpack.c.bf16 %v611, %v610
    %v649 = vpack.c.bf16 %v613, %v612
    %v650 = vpack.c.bf16 %v615, %v614
    %v651 = vpack.c.bf16 %v617, %v616
    %v652 = vpack.c.bf16 %v619, %v618
    %v653 = vpack.c.bf16 %v621, %v620
    %s654 = scalar_lea.vmem [#allocation2], 64
    %v655 = vld [vmem:[%s654] sm:$0xf]
    %v656 = vld [vmem:[%s654 + $0x4] sm:$0xf]
    %v657 = vld [vmem:[%s654 + $0x8] sm:$0xf]
    %v658 = vld [vmem:[%s654 + $0xc] sm:$0xf]
    %v659 = vld [vmem:[%s654 + $0x10] sm:$0xf]
    %v660 = vld [vmem:[%s654 + $0x14] sm:$0xf]
    %v661 = vld [vmem:[%s654 + $0x18] sm:$0xf]
    %v662 = vld [vmem:[%s654 + $0x1c] sm:$0xf]
    %v663 = vld [vmem:[%s654 + $0x20] sm:$0xf]
    %v664 = vld [vmem:[%s654 + $0x24] sm:$0xf]
    %v665 = vld [vmem:[%s654 + $0x28] sm:$0xf]
    %v666 = vld [vmem:[%s654 + $0x2c] sm:$0xf]
    %v667 = vld [vmem:[%s654 + $0x30] sm:$0xf]
    %v668 = vld [vmem:[%s654 + $0x34] sm:$0xf]
    %v669 = vld [vmem:[%s654 + $0x38] sm:$0xf]
    %v670 = vld [vmem:[%s654 + $0x3c] sm:$0xf]
    %s671 = scalar_lea.vmem %s2, 1
    %v672 = vld [vmem:[%s671] sm:$0x1]
    %v674 = vperm.slane %v672, 0
    %v692 = vunpack.c.l.b16 %v655
    %v693 = vunpack.c.l.b16 %v656
    %v694 = vunpack.c.l.b16 %v657
    %v695 = vunpack.c.l.b16 %v658
    %v696 = vunpack.c.l.b16 %v659
    %v697 = vunpack.c.l.b16 %v660
    %v698 = vunpack.c.l.b16 %v661
    %v699 = vunpack.c.l.b16 %v662
    %v700 = vunpack.c.l.b16 %v663
    %v701 = vunpack.c.l.b16 %v664
    %v702 = vunpack.c.l.b16 %v665
    %v703 = vunpack.c.l.b16 %v666
    %v704 = vunpack.c.l.b16 %v667
    %v705 = vunpack.c.l.b16 %v668
    %v706 = vunpack.c.l.b16 %v669
    %v707 = vunpack.c.l.b16 %v670
    %v708 = vpack.c.b16 %v693, %v692
    %v709 = vpack.c.b16 %v695, %v694
    %v710 = vpack.c.b16 %v697, %v696
    %v711 = vpack.c.b16 %v699, %v698
    %v712 = vpack.c.b16 %v701, %v700
    %v713 = vpack.c.b16 %v703, %v702
    %v714 = vpack.c.b16 %v705, %v704
    %v715 = vpack.c.b16 %v707, %v706
    %724 = vmatpush.bf16.msra.mxu0 %v715
    %725 = vmatpush.bf16.msra.mxu0 %v714
    %726 = vmatpush.bf16.msra.mxu0 %v713
    %727 = vmatpush.bf16.msra.mxu0 %v712
    %728 = vmatpush.bf16.msra.mxu0 %v711
    %729 = vmatpush.bf16.msra.mxu0 %v710
    %730 = vmatpush.bf16.msra.mxu0 %v709
    %731 = vmatpush.bf16.msra.mxu0 %v708
    %732 = vmatmul.bf16.gmra.mxu0 %v622
    %v733 = vpop.f32.mrf.mxu0
    %v734 = vadd.f32 %v674, %v733
    %v735 = vpop.f32.mrf.mxu0
    %v736 = vadd.f32 %v674, %v735
    %737 = vmatmul.bf16.gmra.mxu0 %v623
    %v738 = vpop.f32.mrf.mxu0
    %v739 = vadd.f32 %v674, %v738
    %v740 = vpop.f32.mrf.mxu0
    %v741 = vadd.f32 %v674, %v740
    %742 = vmatmul.bf16.gmra.mxu0 %v624
    %v743 = vpop.f32.mrf.mxu0
    %v744 = vadd.f32 %v674, %v743
    %v745 = vpop.f32.mrf.mxu0
    %v746 = vadd.f32 %v674, %v745
    %747 = vmatmul.bf16.gmra.mxu0 %v625
    %v748 = vpop.f32.mrf.mxu0
    %v749 = vadd.f32 %v674, %v748
    %v750 = vpop.f32.mrf.mxu0
    %v751 = vadd.f32 %v674, %v750
    %752 = vmatmul.bf16.gmra.mxu0 %v626
    %v753 = vpop.f32.mrf.mxu0
    %v754 = vadd.f32 %v674, %v753
    %v755 = vpop.f32.mrf.mxu0
    %v756 = vadd.f32 %v674, %v755
    %757 = vmatmul.bf16.gmra.mxu0 %v627
    %v758 = vpop.f32.mrf.mxu0
    %v759 = vadd.f32 %v674, %v758
    %v760 = vpop.f32.mrf.mxu0
    %v761 = vadd.f32 %v674, %v760
    %762 = vmatmul.bf16.gmra.mxu0 %v628
    %v763 = vpop.f32.mrf.mxu0
    %v764 = vadd.f32 %v674, %v763
    %v765 = vpop.f32.mrf.mxu0
    %v766 = vadd.f32 %v674, %v765
    %767 = vmatmul.bf16.gmra.mxu0 %v629
    %v768 = vpop.f32.mrf.mxu0
    %v769 = vadd.f32 %v674, %v768
    %v770 = vpop.f32.mrf.mxu0
    %v771 = vadd.f32 %v674, %v770
    %772 = vmatmul.bf16.gmra.mxu0 %v630
    %v773 = vpop.f32.mrf.mxu0
    %v774 = vadd.f32 %v674, %v773
    %v775 = vpop.f32.mrf.mxu0
    %v776 = vadd.f32 %v674, %v775
    %777 = vmatmul.bf16.gmra.mxu0 %v631
    %v778 = vpop.f32.mrf.mxu0
    %v779 = vadd.f32 %v674, %v778
    %v780 = vpop.f32.mrf.mxu0
    %v781 = vadd.f32 %v674, %v780
    %782 = vmatmul.bf16.gmra.mxu0 %v632
    %v783 = vpop.f32.mrf.mxu0
    %v784 = vadd.f32 %v674, %v783
    %v785 = vpop.f32.mrf.mxu0
    %v786 = vadd.f32 %v674, %v785
    %787 = vmatmul.bf16.gmra.mxu0 %v633
    %v788 = vpop.f32.mrf.mxu0
    %v789 = vadd.f32 %v674, %v788
    %v790 = vpop.f32.mrf.mxu0
    %v791 = vadd.f32 %v674, %v790
    %792 = vmatmul.bf16.gmra.mxu0 %v634
    %v793 = vpop.f32.mrf.mxu0
    %v794 = vadd.f32 %v674, %v793
    %v795 = vpop.f32.mrf.mxu0
    %v796 = vadd.f32 %v674, %v795
    %797 = vmatmul.bf16.gmra.mxu0 %v635
    %v798 = vpop.f32.mrf.mxu0
    %v799 = vadd.f32 %v674, %v798
    %v800 = vpop.f32.mrf.mxu0
    %v801 = vadd.f32 %v674, %v800
    %802 = vmatmul.bf16.gmra.mxu0 %v636
    %v803 = vpop.f32.mrf.mxu0
    %v804 = vadd.f32 %v674, %v803
    %v805 = vpop.f32.mrf.mxu0
    %v806 = vadd.f32 %v674, %v805
    %807 = vmatmul.bf16.gmra.mxu0 %v637
    %v808 = vpop.f32.mrf.mxu0
    %v809 = vadd.f32 %v674, %v808
    %v810 = vpop.f32.mrf.mxu0
    %v811 = vadd.f32 %v674, %v810
    %812 = vmatmul.bf16.gmra.mxu0 %v638
    %v813 = vpop.f32.mrf.mxu0
    %v814 = vadd.f32 %v674, %v813
    %v815 = vpop.f32.mrf.mxu0
    %v816 = vadd.f32 %v674, %v815
    %817 = vmatmul.bf16.gmra.mxu0 %v639
    %v818 = vpop.f32.mrf.mxu0
    %v819 = vadd.f32 %v674, %v818
    %v820 = vpop.f32.mrf.mxu0
    %v821 = vadd.f32 %v674, %v820
    %822 = vmatmul.bf16.gmra.mxu0 %v640
    %v823 = vpop.f32.mrf.mxu0
    %v824 = vadd.f32 %v674, %v823
    %v825 = vpop.f32.mrf.mxu0
    %v826 = vadd.f32 %v674, %v825
    %827 = vmatmul.bf16.gmra.mxu0 %v641
    %v828 = vpop.f32.mrf.mxu0
    %v829 = vadd.f32 %v674, %v828
    %v830 = vpop.f32.mrf.mxu0
    %v831 = vadd.f32 %v674, %v830
    %832 = vmatmul.bf16.gmra.mxu0 %v642
    %v833 = vpop.f32.mrf.mxu0
    %v834 = vadd.f32 %v674, %v833
    %v835 = vpop.f32.mrf.mxu0
    %v836 = vadd.f32 %v674, %v835
    %837 = vmatmul.bf16.gmra.mxu0 %v643
    %v838 = vpop.f32.mrf.mxu0
    %v839 = vadd.f32 %v674, %v838
    %v840 = vpop.f32.mrf.mxu0
    %v841 = vadd.f32 %v674, %v840
    %842 = vmatmul.bf16.gmra.mxu0 %v644
    %v843 = vpop.f32.mrf.mxu0
    %v844 = vadd.f32 %v674, %v843
    %v845 = vpop.f32.mrf.mxu0
    %v846 = vadd.f32 %v674, %v845
    %847 = vmatmul.bf16.gmra.mxu0 %v645
    %v848 = vpop.f32.mrf.mxu0
    %v849 = vadd.f32 %v674, %v848
    %v850 = vpop.f32.mrf.mxu0
    %v851 = vadd.f32 %v674, %v850
    %852 = vmatmul.bf16.gmra.mxu0 %v646
    %v853 = vpop.f32.mrf.mxu0
    %v854 = vadd.f32 %v674, %v853
    %v855 = vpop.f32.mrf.mxu0
    %v856 = vadd.f32 %v674, %v855
    %857 = vmatmul.bf16.gmra.mxu0 %v647
    %v858 = vpop.f32.mrf.mxu0
    %v859 = vadd.f32 %v674, %v858
    %v860 = vpop.f32.mrf.mxu0
    %v861 = vadd.f32 %v674, %v860
    %862 = vmatmul.bf16.gmra.mxu0 %v648
    %v863 = vpop.f32.mrf.mxu0
    %v864 = vadd.f32 %v674, %v863
    %v865 = vpop.f32.mrf.mxu0
    %v866 = vadd.f32 %v674, %v865
    %867 = vmatmul.bf16.gmra.mxu0 %v649
    %v868 = vpop.f32.mrf.mxu0
    %v869 = vadd.f32 %v674, %v868
    %v870 = vpop.f32.mrf.mxu0
    %v871 = vadd.f32 %v674, %v870
    %872 = vmatmul.bf16.gmra.mxu0 %v650
    %v873 = vpop.f32.mrf.mxu0
    %v874 = vadd.f32 %v674, %v873
    %v875 = vpop.f32.mrf.mxu0
    %v876 = vadd.f32 %v674, %v875
    %877 = vmatmul.bf16.gmra.mxu0 %v651
    %v878 = vpop.f32.mrf.mxu0
    %v879 = vadd.f32 %v674, %v878
    %v880 = vpop.f32.mrf.mxu0
    %v881 = vadd.f32 %v674, %v880
    %882 = vmatmul.bf16.gmra.mxu0 %v652
    %v883 = vpop.f32.mrf.mxu0
    %v884 = vadd.f32 %v674, %v883
    %v885 = vpop.f32.mrf.mxu0
    %v886 = vadd.f32 %v674, %v885
    %887 = vmatmul.bf16.gmra.mxu0 %v653
    %v888 = vpop.f32.mrf.mxu0
    %v889 = vadd.f32 %v674, %v888
    %v890 = vpop.f32.mrf.mxu0
    %v891 = vadd.f32 %v674, %v890
    %892 = vdwg.mxu0
    %v893 = vmax.f32 %v734, 0.0
    %v894 = vmax.f32 %v736, 0.0
    %v895 = vmax.f32 %v739, 0.0
    %v896 = vmax.f32 %v741, 0.0
    %v897 = vmax.f32 %v744, 0.0
    %v898 = vmax.f32 %v746, 0.0
    %v899 = vmax.f32 %v749, 0.0
    %v900 = vmax.f32 %v751, 0.0
    %v901 = vmax.f32 %v754, 0.0
    %v902 = vmax.f32 %v756, 0.0
    %v903 = vmax.f32 %v759, 0.0
    %v904 = vmax.f32 %v761, 0.0
    %v905 = vmax.f32 %v764, 0.0
    %v906 = vmax.f32 %v766, 0.0
    %v907 = vmax.f32 %v769, 0.0
    %v908 = vmax.f32 %v771, 0.0
    %v909 = vmax.f32 %v774, 0.0
    %v910 = vmax.f32 %v776, 0.0
    %v911 = vmax.f32 %v779, 0.0
    %v912 = vmax.f32 %v781, 0.0
    %v913 = vmax.f32 %v784, 0.0
    %v914 = vmax.f32 %v786, 0.0
    %v915 = vmax.f32 %v789, 0.0
    %v916 = vmax.f32 %v791, 0.0
    %v917 = vmax.f32 %v794, 0.0
    %v918 = vmax.f32 %v796, 0.0
    %v919 = vmax.f32 %v799, 0.0
    %v920 = vmax.f32 %v801, 0.0
    %v921 = vmax.f32 %v804, 0.0
    %v922 = vmax.f32 %v806, 0.0
    %v923 = vmax.f32 %v809, 0.0
    %v924 = vmax.f32 %v811, 0.0
    %v925 = vmax.f32 %v814, 0.0
    %v926 = vmax.f32 %v816, 0.0
    %v927 = vmax.f32 %v819, 0.0
    %v928 = vmax.f32 %v821, 0.0
    %v929 = vmax.f32 %v824, 0.0
    %v930 = vmax.f32 %v826, 0.0
    %v931 = vmax.f32 %v829, 0.0
    %v932 = vmax.f32 %v831, 0.0
    %v933 = vmax.f32 %v834, 0.0
    %v934 = vmax.f32 %v836, 0.0
    %v935 = vmax.f32 %v839, 0.0
    %v936 = vmax.f32 %v841, 0.0
    %v937 = vmax.f32 %v844, 0.0
    %v938 = vmax.f32 %v846, 0.0
    %v939 = vmax.f32 %v849, 0.0
    %v940 = vmax.f32 %v851, 0.0
    %v941 = vmax.f32 %v854, 0.0
    %v942 = vmax.f32 %v856, 0.0
    %v943 = vmax.f32 %v859, 0.0
    %v944 = vmax.f32 %v861, 0.0
    %v945 = vmax.f32 %v864, 0.0
    %v946 = vmax.f32 %v866, 0.0
    %v947 = vmax.f32 %v869, 0.0
    %v948 = vmax.f32 %v871, 0.0
    %v949 = vmax.f32 %v874, 0.0
    %v950 = vmax.f32 %v876, 0.0
    %v951 = vmax.f32 %v879, 0.0
    %v952 = vmax.f32 %v881, 0.0
    %v953 = vmax.f32 %v884, 0.0
    %v954 = vmax.f32 %v886, 0.0
    %v955 = vmax.f32 %v889, 0.0
    %v956 = vmax.f32 %v891, 0.0
    %v957 = vpack.c.bf16 %v894, %v893
    %v958 = vpack.c.bf16 %v896, %v895
    %v959 = vpack.c.bf16 %v898, %v897
    %v960 = vpack.c.bf16 %v900, %v899
    %v961 = vpack.c.bf16 %v902, %v901
    %v962 = vpack.c.bf16 %v904, %v903
    %v963 = vpack.c.bf16 %v906, %v905
    %v964 = vpack.c.bf16 %v908, %v907
    %v965 = vpack.c.bf16 %v910, %v909
    %v966 = vpack.c.bf16 %v912, %v911
    %v967 = vpack.c.bf16 %v914, %v913
    %v968 = vpack.c.bf16 %v916, %v915
    %v969 = vpack.c.bf16 %v918, %v917
    %v970 = vpack.c.bf16 %v920, %v919
    %v971 = vpack.c.bf16 %v922, %v921
    %v972 = vpack.c.bf16 %v924, %v923
    %v973 = vpack.c.bf16 %v926, %v925
    %v974 = vpack.c.bf16 %v928, %v927
    %v975 = vpack.c.bf16 %v930, %v929
    %v976 = vpack.c.bf16 %v932, %v931
    %v977 = vpack.c.bf16 %v934, %v933
    %v978 = vpack.c.bf16 %v936, %v935
    %v979 = vpack.c.bf16 %v938, %v937
    %v980 = vpack.c.bf16 %v940, %v939
    %v981 = vpack.c.bf16 %v942, %v941
    %v982 = vpack.c.bf16 %v944, %v943
    %v983 = vpack.c.bf16 %v946, %v945
    %v984 = vpack.c.bf16 %v948, %v947
    %v985 = vpack.c.bf16 %v950, %v949
    %v986 = vpack.c.bf16 %v952, %v951
    %v987 = vpack.c.bf16 %v954, %v953
    %v988 = vpack.c.bf16 %v956, %v955
    %s989 = scalar_lea.vmem [#allocation2], 128
    %v990 = vld [vmem:[%s989] sm:$0xf]
    %v991 = vld [vmem:[%s989 + $0x4] sm:$0xf]
    %v992 = vld [vmem:[%s989 + $0x8] sm:$0xf]
    %v993 = vld [vmem:[%s989 + $0xc] sm:$0xf]
    %v994 = vld [vmem:[%s989 + $0x10] sm:$0xf]
    %v995 = vld [vmem:[%s989 + $0x14] sm:$0xf]
    %v996 = vld [vmem:[%s989 + $0x18] sm:$0xf]
    %v997 = vld [vmem:[%s989 + $0x1c] sm:$0xf]
    %v998 = vld [vmem:[%s989 + $0x20] sm:$0xf]
    %v999 = vld [vmem:[%s989 + $0x24] sm:$0xf]
    %v1000 = vld [vmem:[%s989 + $0x28] sm:$0xf]
    %v1001 = vld [vmem:[%s989 + $0x2c] sm:$0xf]
    %v1002 = vld [vmem:[%s989 + $0x30] sm:$0xf]
    %v1003 = vld [vmem:[%s989 + $0x34] sm:$0xf]
    %v1004 = vld [vmem:[%s989 + $0x38] sm:$0xf]
    %v1005 = vld [vmem:[%s989 + $0x3c] sm:$0xf]
    %s1006 = scalar_lea.vmem %s2, 2
    %v1007 = vld [vmem:[%s1006] sm:$0x1]
    %v1009 = vperm.slane %v1007, 0
    %v1027 = vunpack.c.l.b16 %v990
    %v1028 = vunpack.c.l.b16 %v991
    %v1029 = vunpack.c.l.b16 %v992
    %v1030 = vunpack.c.l.b16 %v993
    %v1031 = vunpack.c.l.b16 %v994
    %v1032 = vunpack.c.l.b16 %v995
    %v1033 = vunpack.c.l.b16 %v996
    %v1034 = vunpack.c.l.b16 %v997
    %v1035 = vunpack.c.l.b16 %v998
    %v1036 = vunpack.c.l.b16 %v999
    %v1037 = vunpack.c.l.b16 %v1000
    %v1038 = vunpack.c.l.b16 %v1001
    %v1039 = vunpack.c.l.b16 %v1002
    %v1040 = vunpack.c.l.b16 %v1003
    %v1041 = vunpack.c.l.b16 %v1004
    %v1042 = vunpack.c.l.b16 %v1005
    %v1043 = vpack.c.b16 %v1028, %v1027
    %v1044 = vpack.c.b16 %v1030, %v1029
    %v1045 = vpack.c.b16 %v1032, %v1031
    %v1046 = vpack.c.b16 %v1034, %v1033
    %v1047 = vpack.c.b16 %v1036, %v1035
    %v1048 = vpack.c.b16 %v1038, %v1037
    %v1049 = vpack.c.b16 %v1040, %v1039
    %v1050 = vpack.c.b16 %v1042, %v1041
    %1059 = vmatpush.bf16.msra.mxu0 %v1050
    %1060 = vmatpush.bf16.msra.mxu0 %v1049
    %1061 = vmatpush.bf16.msra.mxu0 %v1048
    %1062 = vmatpush.bf16.msra.mxu0 %v1047
    %1063 = vmatpush.bf16.msra.mxu0 %v1046
    %1064 = vmatpush.bf16.msra.mxu0 %v1045
    %1065 = vmatpush.bf16.msra.mxu0 %v1044
    %1066 = vmatpush.bf16.msra.mxu0 %v1043
    %1067 = vmatmul.bf16.gmra.mxu0 %v957
    %v1068 = vpop.f32.mrf.mxu0
    %v1069 = vadd.f32 %v1009, %v1068
    %v1070 = vpop.f32.mrf.mxu0
    %v1071 = vadd.f32 %v1009, %v1070
    %1072 = vmatmul.bf16.gmra.mxu0 %v958
    %v1073 = vpop.f32.mrf.mxu0
    %v1074 = vadd.f32 %v1009, %v1073
    %v1075 = vpop.f32.mrf.mxu0
    %v1076 = vadd.f32 %v1009, %v1075
    %1077 = vmatmul.bf16.gmra.mxu0 %v959
    %v1078 = vpop.f32.mrf.mxu0
    %v1079 = vadd.f32 %v1009, %v1078
    %v1080 = vpop.f32.mrf.mxu0
    %v1081 = vadd.f32 %v1009, %v1080
    %1082 = vmatmul.bf16.gmra.mxu0 %v960
    %v1083 = vpop.f32.mrf.mxu0
    %v1084 = vadd.f32 %v1009, %v1083
    %v1085 = vpop.f32.mrf.mxu0
    %v1086 = vadd.f32 %v1009, %v1085
    %1087 = vmatmul.bf16.gmra.mxu0 %v961
    %v1088 = vpop.f32.mrf.mxu0
    %v1089 = vadd.f32 %v1009, %v1088
    %v1090 = vpop.f32.mrf.mxu0
    %v1091 = vadd.f32 %v1009, %v1090
    %1092 = vmatmul.bf16.gmra.mxu0 %v962
    %v1093 = vpop.f32.mrf.mxu0
    %v1094 = vadd.f32 %v1009, %v1093
    %v1095 = vpop.f32.mrf.mxu0
    %v1096 = vadd.f32 %v1009, %v1095
    %1097 = vmatmul.bf16.gmra.mxu0 %v963
    %v1098 = vpop.f32.mrf.mxu0
    %v1099 = vadd.f32 %v1009, %v1098
    %v1100 = vpop.f32.mrf.mxu0
    %v1101 = vadd.f32 %v1009, %v1100
    %1102 = vmatmul.bf16.gmra.mxu0 %v964
    %v1103 = vpop.f32.mrf.mxu0
    %v1104 = vadd.f32 %v1009, %v1103
    %v1105 = vpop.f32.mrf.mxu0
    %v1106 = vadd.f32 %v1009, %v1105
    %1107 = vmatmul.bf16.gmra.mxu0 %v965
    %v1108 = vpop.f32.mrf.mxu0
    %v1109 = vadd.f32 %v1009, %v1108
    %v1110 = vpop.f32.mrf.mxu0
    %v1111 = vadd.f32 %v1009, %v1110
    %1112 = vmatmul.bf16.gmra.mxu0 %v966
    %v1113 = vpop.f32.mrf.mxu0
    %v1114 = vadd.f32 %v1009, %v1113
    %v1115 = vpop.f32.mrf.mxu0
    %v1116 = vadd.f32 %v1009, %v1115
    %1117 = vmatmul.bf16.gmra.mxu0 %v967
    %v1118 = vpop.f32.mrf.mxu0
    %v1119 = vadd.f32 %v1009, %v1118
    %v1120 = vpop.f32.mrf.mxu0
    %v1121 = vadd.f32 %v1009, %v1120
    %1122 = vmatmul.bf16.gmra.mxu0 %v968
    %v1123 = vpop.f32.mrf.mxu0
    %v1124 = vadd.f32 %v1009, %v1123
    %v1125 = vpop.f32.mrf.mxu0
    %v1126 = vadd.f32 %v1009, %v1125
    %1127 = vmatmul.bf16.gmra.mxu0 %v969
    %v1128 = vpop.f32.mrf.mxu0
    %v1129 = vadd.f32 %v1009, %v1128
    %v1130 = vpop.f32.mrf.mxu0
    %v1131 = vadd.f32 %v1009, %v1130
    %1132 = vmatmul.bf16.gmra.mxu0 %v970
    %v1133 = vpop.f32.mrf.mxu0
    %v1134 = vadd.f32 %v1009, %v1133
    %v1135 = vpop.f32.mrf.mxu0
    %v1136 = vadd.f32 %v1009, %v1135
    %1137 = vmatmul.bf16.gmra.mxu0 %v971
    %v1138 = vpop.f32.mrf.mxu0
    %v1139 = vadd.f32 %v1009, %v1138
    %v1140 = vpop.f32.mrf.mxu0
    %v1141 = vadd.f32 %v1009, %v1140
    %1142 = vmatmul.bf16.gmra.mxu0 %v972
    %v1143 = vpop.f32.mrf.mxu0
    %v1144 = vadd.f32 %v1009, %v1143
    %v1145 = vpop.f32.mrf.mxu0
    %v1146 = vadd.f32 %v1009, %v1145
    %1147 = vmatmul.bf16.gmra.mxu0 %v973
    %v1148 = vpop.f32.mrf.mxu0
    %v1149 = vadd.f32 %v1009, %v1148
    %v1150 = vpop.f32.mrf.mxu0
    %v1151 = vadd.f32 %v1009, %v1150
    %1152 = vmatmul.bf16.gmra.mxu0 %v974
    %v1153 = vpop.f32.mrf.mxu0
    %v1154 = vadd.f32 %v1009, %v1153
    %v1155 = vpop.f32.mrf.mxu0
    %v1156 = vadd.f32 %v1009, %v1155
    %1157 = vmatmul.bf16.gmra.mxu0 %v975
    %v1158 = vpop.f32.mrf.mxu0
    %v1159 = vadd.f32 %v1009, %v1158
    %v1160 = vpop.f32.mrf.mxu0
    %v1161 = vadd.f32 %v1009, %v1160
    %1162 = vmatmul.bf16.gmra.mxu0 %v976
    %v1163 = vpop.f32.mrf.mxu0
    %v1164 = vadd.f32 %v1009, %v1163
    %v1165 = vpop.f32.mrf.mxu0
    %v1166 = vadd.f32 %v1009, %v1165
    %1167 = vmatmul.bf16.gmra.mxu0 %v977
    %v1168 = vpop.f32.mrf.mxu0
    %v1169 = vadd.f32 %v1009, %v1168
    %v1170 = vpop.f32.mrf.mxu0
    %v1171 = vadd.f32 %v1009, %v1170
    %1172 = vmatmul.bf16.gmra.mxu0 %v978
    %v1173 = vpop.f32.mrf.mxu0
    %v1174 = vadd.f32 %v1009, %v1173
    %v1175 = vpop.f32.mrf.mxu0
    %v1176 = vadd.f32 %v1009, %v1175
    %1177 = vmatmul.bf16.gmra.mxu0 %v979
    %v1178 = vpop.f32.mrf.mxu0
    %v1179 = vadd.f32 %v1009, %v1178
    %v1180 = vpop.f32.mrf.mxu0
    %v1181 = vadd.f32 %v1009, %v1180
    %1182 = vmatmul.bf16.gmra.mxu0 %v980
    %v1183 = vpop.f32.mrf.mxu0
    %v1184 = vadd.f32 %v1009, %v1183
    %v1185 = vpop.f32.mrf.mxu0
    %v1186 = vadd.f32 %v1009, %v1185
    %1187 = vmatmul.bf16.gmra.mxu0 %v981
    %v1188 = vpop.f32.mrf.mxu0
    %v1189 = vadd.f32 %v1009, %v1188
    %v1190 = vpop.f32.mrf.mxu0
    %v1191 = vadd.f32 %v1009, %v1190
    %1192 = vmatmul.bf16.gmra.mxu0 %v982
    %v1193 = vpop.f32.mrf.mxu0
    %v1194 = vadd.f32 %v1009, %v1193
    %v1195 = vpop.f32.mrf.mxu0
    %v1196 = vadd.f32 %v1009, %v1195
    %1197 = vmatmul.bf16.gmra.mxu0 %v983
    %v1198 = vpop.f32.mrf.mxu0
    %v1199 = vadd.f32 %v1009, %v1198
    %v1200 = vpop.f32.mrf.mxu0
    %v1201 = vadd.f32 %v1009, %v1200
    %1202 = vmatmul.bf16.gmra.mxu0 %v984
    %v1203 = vpop.f32.mrf.mxu0
    %v1204 = vadd.f32 %v1009, %v1203
    %v1205 = vpop.f32.mrf.mxu0
    %v1206 = vadd.f32 %v1009, %v1205
    %1207 = vmatmul.bf16.gmra.mxu0 %v985
    %v1208 = vpop.f32.mrf.mxu0
    %v1209 = vadd.f32 %v1009, %v1208
    %v1210 = vpop.f32.mrf.mxu0
    %v1211 = vadd.f32 %v1009, %v1210
    %1212 = vmatmul.bf16.gmra.mxu0 %v986
    %v1213 = vpop.f32.mrf.mxu0
    %v1214 = vadd.f32 %v1009, %v1213
    %v1215 = vpop.f32.mrf.mxu0
    %v1216 = vadd.f32 %v1009, %v1215
    %1217 = vmatmul.bf16.gmra.mxu0 %v987
    %v1218 = vpop.f32.mrf.mxu0
    %v1219 = vadd.f32 %v1009, %v1218
    %v1220 = vpop.f32.mrf.mxu0
    %v1221 = vadd.f32 %v1009, %v1220
    %1222 = vmatmul.bf16.gmra.mxu0 %v988
    %v1223 = vpop.f32.mrf.mxu0
    %v1224 = vadd.f32 %v1009, %v1223
    %v1225 = vpop.f32.mrf.mxu0
    %v1226 = vadd.f32 %v1009, %v1225
    %1227 = vdwg.mxu0
    %v1228 = vmax.f32 %v1069, 0.0
    %v1229 = vmax.f32 %v1071, 0.0
    %v1230 = vmax.f32 %v1074, 0.0
    %v1231 = vmax.f32 %v1076, 0.0
    %v1232 = vmax.f32 %v1079, 0.0
    %v1233 = vmax.f32 %v1081, 0.0
    %v1234 = vmax.f32 %v1084, 0.0
    %v1235 = vmax.f32 %v1086, 0.0
    %v1236 = vmax.f32 %v1089, 0.0
    %v1237 = vmax.f32 %v1091, 0.0
    %v1238 = vmax.f32 %v1094, 0.0
    %v1239 = vmax.f32 %v1096, 0.0
    %v1240 = vmax.f32 %v1099, 0.0
    %v1241 = vmax.f32 %v1101, 0.0
    %v1242 = vmax.f32 %v1104, 0.0
    %v1243 = vmax.f32 %v1106, 0.0
    %v1244 = vmax.f32 %v1109, 0.0
    %v1245 = vmax.f32 %v1111, 0.0
    %v1246 = vmax.f32 %v1114, 0.0
    %v1247 = vmax.f32 %v1116, 0.0
    %v1248 = vmax.f32 %v1119, 0.0
    %v1249 = vmax.f32 %v1121, 0.0
    %v1250 = vmax.f32 %v1124, 0.0
    %v1251 = vmax.f32 %v1126, 0.0
    %v1252 = vmax.f32 %v1129, 0.0
    %v1253 = vmax.f32 %v1131, 0.0
    %v1254 = vmax.f32 %v1134, 0.0
    %v1255 = vmax.f32 %v1136, 0.0
    %v1256 = vmax.f32 %v1139, 0.0
    %v1257 = vmax.f32 %v1141, 0.0
    %v1258 = vmax.f32 %v1144, 0.0
    %v1259 = vmax.f32 %v1146, 0.0
    %v1260 = vmax.f32 %v1149, 0.0
    %v1261 = vmax.f32 %v1151, 0.0
    %v1262 = vmax.f32 %v1154, 0.0
    %v1263 = vmax.f32 %v1156, 0.0
    %v1264 = vmax.f32 %v1159, 0.0
    %v1265 = vmax.f32 %v1161, 0.0
    %v1266 = vmax.f32 %v1164, 0.0
    %v1267 = vmax.f32 %v1166, 0.0
    %v1268 = vmax.f32 %v1169, 0.0
    %v1269 = vmax.f32 %v1171, 0.0
    %v1270 = vmax.f32 %v1174, 0.0
    %v1271 = vmax.f32 %v1176, 0.0
    %v1272 = vmax.f32 %v1179, 0.0
    %v1273 = vmax.f32 %v1181, 0.0
    %v1274 = vmax.f32 %v1184, 0.0
    %v1275 = vmax.f32 %v1186, 0.0
    %v1276 = vmax.f32 %v1189, 0.0
    %v1277 = vmax.f32 %v1191, 0.0
    %v1278 = vmax.f32 %v1194, 0.0
    %v1279 = vmax.f32 %v1196, 0.0
    %v1280 = vmax.f32 %v1199, 0.0
    %v1281 = vmax.f32 %v1201, 0.0
    %v1282 = vmax.f32 %v1204, 0.0
    %v1283 = vmax.f32 %v1206, 0.0
    %v1284 = vmax.f32 %v1209, 0.0
    %v1285 = vmax.f32 %v1211, 0.0
    %v1286 = vmax.f32 %v1214, 0.0
    %v1287 = vmax.f32 %v1216, 0.0
    %v1288 = vmax.f32 %v1219, 0.0
    %v1289 = vmax.f32 %v1221, 0.0
    %v1290 = vmax.f32 %v1224, 0.0
    %v1291 = vmax.f32 %v1226, 0.0
    %v1292 = vpack.c.bf16 %v1229, %v1228
    %v1293 = vpack.c.bf16 %v1231, %v1230
    %v1294 = vpack.c.bf16 %v1233, %v1232
    %v1295 = vpack.c.bf16 %v1235, %v1234
    %v1296 = vpack.c.bf16 %v1237, %v1236
    %v1297 = vpack.c.bf16 %v1239, %v1238
    %v1298 = vpack.c.bf16 %v1241, %v1240
    %v1299 = vpack.c.bf16 %v1243, %v1242
    %v1300 = vpack.c.bf16 %v1245, %v1244
    %v1301 = vpack.c.bf16 %v1247, %v1246
    %v1302 = vpack.c.bf16 %v1249, %v1248
    %v1303 = vpack.c.bf16 %v1251, %v1250
    %v1304 = vpack.c.bf16 %v1253, %v1252
    %v1305 = vpack.c.bf16 %v1255, %v1254
    %v1306 = vpack.c.bf16 %v1257, %v1256
    %v1307 = vpack.c.bf16 %v1259, %v1258
    %v1308 = vpack.c.bf16 %v1261, %v1260
    %v1309 = vpack.c.bf16 %v1263, %v1262
    %v1310 = vpack.c.bf16 %v1265, %v1264
    %v1311 = vpack.c.bf16 %v1267, %v1266
    %v1312 = vpack.c.bf16 %v1269, %v1268
    %v1313 = vpack.c.bf16 %v1271, %v1270
    %v1314 = vpack.c.bf16 %v1273, %v1272
    %v1315 = vpack.c.bf16 %v1275, %v1274
    %v1316 = vpack.c.bf16 %v1277, %v1276
    %v1317 = vpack.c.bf16 %v1279, %v1278
    %v1318 = vpack.c.bf16 %v1281, %v1280
    %v1319 = vpack.c.bf16 %v1283, %v1282
    %v1320 = vpack.c.bf16 %v1285, %v1284
    %v1321 = vpack.c.bf16 %v1287, %v1286
    %v1322 = vpack.c.bf16 %v1289, %v1288
    %v1323 = vpack.c.bf16 %v1291, %v1290
    %s1324 = scalar_lea.vmem [#allocation2], 192
    %v1325 = vld [vmem:[%s1324] sm:$0xf]
    %v1326 = vld [vmem:[%s1324 + $0x4] sm:$0xf]
    %v1327 = vld [vmem:[%s1324 + $0x8] sm:$0xf]
    %v1328 = vld [vmem:[%s1324 + $0xc] sm:$0xf]
    %v1329 = vld [vmem:[%s1324 + $0x10] sm:$0xf]
    %v1330 = vld [vmem:[%s1324 + $0x14] sm:$0xf]
    %v1331 = vld [vmem:[%s1324 + $0x18] sm:$0xf]
    %v1332 = vld [vmem:[%s1324 + $0x1c] sm:$0xf]
    %v1333 = vld [vmem:[%s1324 + $0x20] sm:$0xf]
    %v1334 = vld [vmem:[%s1324 + $0x24] sm:$0xf]
    %v1335 = vld [vmem:[%s1324 + $0x28] sm:$0xf]
    %v1336 = vld [vmem:[%s1324 + $0x2c] sm:$0xf]
    %v1337 = vld [vmem:[%s1324 + $0x30] sm:$0xf]
    %v1338 = vld [vmem:[%s1324 + $0x34] sm:$0xf]
    %v1339 = vld [vmem:[%s1324 + $0x38] sm:$0xf]
    %v1340 = vld [vmem:[%s1324 + $0x3c] sm:$0xf]
    %s1341 = scalar_lea.vmem %s2, 3
    %v1342 = vld [vmem:[%s1341] sm:$0x1]
    %v1344 = vperm.slane %v1342, 0
    %v1362 = vunpack.c.l.b16 %v1325
    %v1363 = vunpack.c.l.b16 %v1326
    %v1364 = vunpack.c.l.b16 %v1327
    %v1365 = vunpack.c.l.b16 %v1328
    %v1366 = vunpack.c.l.b16 %v1329
    %v1367 = vunpack.c.l.b16 %v1330
    %v1368 = vunpack.c.l.b16 %v1331
    %v1369 = vunpack.c.l.b16 %v1332
    %v1370 = vunpack.c.l.b16 %v1333
    %v1371 = vunpack.c.l.b16 %v1334
    %v1372 = vunpack.c.l.b16 %v1335
    %v1373 = vunpack.c.l.b16 %v1336
    %v1374 = vunpack.c.l.b16 %v1337
    %v1375 = vunpack.c.l.b16 %v1338
    %v1376 = vunpack.c.l.b16 %v1339
    %v1377 = vunpack.c.l.b16 %v1340
    %v1378 = vpack.c.b16 %v1363, %v1362
    %v1379 = vpack.c.b16 %v1365, %v1364
    %v1380 = vpack.c.b16 %v1367, %v1366
    %v1381 = vpack.c.b16 %v1369, %v1368
    %v1382 = vpack.c.b16 %v1371, %v1370
    %v1383 = vpack.c.b16 %v1373, %v1372
    %v1384 = vpack.c.b16 %v1375, %v1374
    %v1385 = vpack.c.b16 %v1377, %v1376
    %1394 = vmatpush.bf16.msra.mxu0 %v1385
    %1395 = vmatpush.bf16.msra.mxu0 %v1384
    %1396 = vmatpush.bf16.msra.mxu0 %v1383
    %1397 = vmatpush.bf16.msra.mxu0 %v1382
    %1398 = vmatpush.bf16.msra.mxu0 %v1381
    %1399 = vmatpush.bf16.msra.mxu0 %v1380
    %1400 = vmatpush.bf16.msra.mxu0 %v1379
    %1401 = vmatpush.bf16.msra.mxu0 %v1378
    %1402 = vmatmul.bf16.gmra.mxu0 %v1292
    %v1403 = vpop.f32.mrf.mxu0
    %v1404 = vadd.f32 %v1344, %v1403
    %v1405 = vpop.f32.mrf.mxu0
    %v1406 = vadd.f32 %v1344, %v1405
    %1407 = vmatmul.bf16.gmra.mxu0 %v1293
    %v1408 = vpop.f32.mrf.mxu0
    %v1409 = vadd.f32 %v1344, %v1408
    %v1410 = vpop.f32.mrf.mxu0
    %v1411 = vadd.f32 %v1344, %v1410
    %1412 = vmatmul.bf16.gmra.mxu0 %v1294
    %v1413 = vpop.f32.mrf.mxu0
    %v1414 = vadd.f32 %v1344, %v1413
    %v1415 = vpop.f32.mrf.mxu0
    %v1416 = vadd.f32 %v1344, %v1415
    %1417 = vmatmul.bf16.gmra.mxu0 %v1295
    %v1418 = vpop.f32.mrf.mxu0
    %v1419 = vadd.f32 %v1344, %v1418
    %v1420 = vpop.f32.mrf.mxu0
    %v1421 = vadd.f32 %v1344, %v1420
    %1422 = vmatmul.bf16.gmra.mxu0 %v1296
    %v1423 = vpop.f32.mrf.mxu0
    %v1424 = vadd.f32 %v1344, %v1423
    %v1425 = vpop.f32.mrf.mxu0
    %v1426 = vadd.f32 %v1344, %v1425
    %1427 = vmatmul.bf16.gmra.mxu0 %v1297
    %v1428 = vpop.f32.mrf.mxu0
    %v1429 = vadd.f32 %v1344, %v1428
    %v1430 = vpop.f32.mrf.mxu0
    %v1431 = vadd.f32 %v1344, %v1430
    %1432 = vmatmul.bf16.gmra.mxu0 %v1298
    %v1433 = vpop.f32.mrf.mxu0
    %v1434 = vadd.f32 %v1344, %v1433
    %v1435 = vpop.f32.mrf.mxu0
    %v1436 = vadd.f32 %v1344, %v1435
    %1437 = vmatmul.bf16.gmra.mxu0 %v1299
    %v1438 = vpop.f32.mrf.mxu0
    %v1439 = vadd.f32 %v1344, %v1438
    %v1440 = vpop.f32.mrf.mxu0
    %v1441 = vadd.f32 %v1344, %v1440
    %1442 = vmatmul.bf16.gmra.mxu0 %v1300
    %v1443 = vpop.f32.mrf.mxu0
    %v1444 = vadd.f32 %v1344, %v1443
    %v1445 = vpop.f32.mrf.mxu0
    %v1446 = vadd.f32 %v1344, %v1445
    %1447 = vmatmul.bf16.gmra.mxu0 %v1301
    %v1448 = vpop.f32.mrf.mxu0
    %v1449 = vadd.f32 %v1344, %v1448
    %v1450 = vpop.f32.mrf.mxu0
    %v1451 = vadd.f32 %v1344, %v1450
    %1452 = vmatmul.bf16.gmra.mxu0 %v1302
    %v1453 = vpop.f32.mrf.mxu0
    %v1454 = vadd.f32 %v1344, %v1453
    %v1455 = vpop.f32.mrf.mxu0
    %v1456 = vadd.f32 %v1344, %v1455
    %1457 = vmatmul.bf16.gmra.mxu0 %v1303
    %v1458 = vpop.f32.mrf.mxu0
    %v1459 = vadd.f32 %v1344, %v1458
    %v1460 = vpop.f32.mrf.mxu0
    %v1461 = vadd.f32 %v1344, %v1460
    %1462 = vmatmul.bf16.gmra.mxu0 %v1304
    %v1463 = vpop.f32.mrf.mxu0
    %v1464 = vadd.f32 %v1344, %v1463
    %v1465 = vpop.f32.mrf.mxu0
    %v1466 = vadd.f32 %v1344, %v1465
    %1467 = vmatmul.bf16.gmra.mxu0 %v1305
    %v1468 = vpop.f32.mrf.mxu0
    %v1469 = vadd.f32 %v1344, %v1468
    %v1470 = vpop.f32.mrf.mxu0
    %v1471 = vadd.f32 %v1344, %v1470
    %1472 = vmatmul.bf16.gmra.mxu0 %v1306
    %v1473 = vpop.f32.mrf.mxu0
    %v1474 = vadd.f32 %v1344, %v1473
    %v1475 = vpop.f32.mrf.mxu0
    %v1476 = vadd.f32 %v1344, %v1475
    %1477 = vmatmul.bf16.gmra.mxu0 %v1307
    %v1478 = vpop.f32.mrf.mxu0
    %v1479 = vadd.f32 %v1344, %v1478
    %v1480 = vpop.f32.mrf.mxu0
    %v1481 = vadd.f32 %v1344, %v1480
    %1482 = vmatmul.bf16.gmra.mxu0 %v1308
    %v1483 = vpop.f32.mrf.mxu0
    %v1484 = vadd.f32 %v1344, %v1483
    %v1485 = vpop.f32.mrf.mxu0
    %v1486 = vadd.f32 %v1344, %v1485
    %1487 = vmatmul.bf16.gmra.mxu0 %v1309
    %v1488 = vpop.f32.mrf.mxu0
    %v1489 = vadd.f32 %v1344, %v1488
    %v1490 = vpop.f32.mrf.mxu0
    %v1491 = vadd.f32 %v1344, %v1490
    %1492 = vmatmul.bf16.gmra.mxu0 %v1310
    %v1493 = vpop.f32.mrf.mxu0
    %v1494 = vadd.f32 %v1344, %v1493
    %v1495 = vpop.f32.mrf.mxu0
    %v1496 = vadd.f32 %v1344, %v1495
    %1497 = vmatmul.bf16.gmra.mxu0 %v1311
    %v1498 = vpop.f32.mrf.mxu0
    %v1499 = vadd.f32 %v1344, %v1498
    %v1500 = vpop.f32.mrf.mxu0
    %v1501 = vadd.f32 %v1344, %v1500
    %1502 = vmatmul.bf16.gmra.mxu0 %v1312
    %v1503 = vpop.f32.mrf.mxu0
    %v1504 = vadd.f32 %v1344, %v1503
    %v1505 = vpop.f32.mrf.mxu0
    %v1506 = vadd.f32 %v1344, %v1505
    %1507 = vmatmul.bf16.gmra.mxu0 %v1313
    %v1508 = vpop.f32.mrf.mxu0
    %v1509 = vadd.f32 %v1344, %v1508
    %v1510 = vpop.f32.mrf.mxu0
    %v1511 = vadd.f32 %v1344, %v1510
    %1512 = vmatmul.bf16.gmra.mxu0 %v1314
    %v1513 = vpop.f32.mrf.mxu0
    %v1514 = vadd.f32 %v1344, %v1513
    %v1515 = vpop.f32.mrf.mxu0
    %v1516 = vadd.f32 %v1344, %v1515
    %1517 = vmatmul.bf16.gmra.mxu0 %v1315
    %v1518 = vpop.f32.mrf.mxu0
    %v1519 = vadd.f32 %v1344, %v1518
    %v1520 = vpop.f32.mrf.mxu0
    %v1521 = vadd.f32 %v1344, %v1520
    %1522 = vmatmul.bf16.gmra.mxu0 %v1316
    %v1523 = vpop.f32.mrf.mxu0
    %v1524 = vadd.f32 %v1344, %v1523
    %v1525 = vpop.f32.mrf.mxu0
    %v1526 = vadd.f32 %v1344, %v1525
    %1527 = vmatmul.bf16.gmra.mxu0 %v1317
    %v1528 = vpop.f32.mrf.mxu0
    %v1529 = vadd.f32 %v1344, %v1528
    %v1530 = vpop.f32.mrf.mxu0
    %v1531 = vadd.f32 %v1344, %v1530
    %1532 = vmatmul.bf16.gmra.mxu0 %v1318
    %v1533 = vpop.f32.mrf.mxu0
    %v1534 = vadd.f32 %v1344, %v1533
    %v1535 = vpop.f32.mrf.mxu0
    %v1536 = vadd.f32 %v1344, %v1535
    %1537 = vmatmul.bf16.gmra.mxu0 %v1319
    %v1538 = vpop.f32.mrf.mxu0
    %v1539 = vadd.f32 %v1344, %v1538
    %v1540 = vpop.f32.mrf.mxu0
    %v1541 = vadd.f32 %v1344, %v1540
    %1542 = vmatmul.bf16.gmra.mxu0 %v1320
    %v1543 = vpop.f32.mrf.mxu0
    %v1544 = vadd.f32 %v1344, %v1543
    %v1545 = vpop.f32.mrf.mxu0
    %v1546 = vadd.f32 %v1344, %v1545
    %1547 = vmatmul.bf16.gmra.mxu0 %v1321
    %v1548 = vpop.f32.mrf.mxu0
    %v1549 = vadd.f32 %v1344, %v1548
    %v1550 = vpop.f32.mrf.mxu0
    %v1551 = vadd.f32 %v1344, %v1550
    %1552 = vmatmul.bf16.gmra.mxu0 %v1322
    %v1553 = vpop.f32.mrf.mxu0
    %v1554 = vadd.f32 %v1344, %v1553
    %v1555 = vpop.f32.mrf.mxu0
    %v1556 = vadd.f32 %v1344, %v1555
    %1557 = vmatmul.bf16.gmra.mxu0 %v1323
    %v1558 = vpop.f32.mrf.mxu0
    %v1559 = vadd.f32 %v1344, %v1558
    %v1560 = vpop.f32.mrf.mxu0
    %v1561 = vadd.f32 %v1344, %v1560
    %1562 = vdwg.mxu0
    %v1563 = vmax.f32 %v1404, 0.0
    %v1564 = vmax.f32 %v1406, 0.0
    %v1565 = vmax.f32 %v1409, 0.0
    %v1566 = vmax.f32 %v1411, 0.0
    %v1567 = vmax.f32 %v1414, 0.0
    %v1568 = vmax.f32 %v1416, 0.0
    %v1569 = vmax.f32 %v1419, 0.0
    %v1570 = vmax.f32 %v1421, 0.0
    %v1571 = vmax.f32 %v1424, 0.0
    %v1572 = vmax.f32 %v1426, 0.0
    %v1573 = vmax.f32 %v1429, 0.0
    %v1574 = vmax.f32 %v1431, 0.0
    %v1575 = vmax.f32 %v1434, 0.0
    %v1576 = vmax.f32 %v1436, 0.0
    %v1577 = vmax.f32 %v1439, 0.0
    %v1578 = vmax.f32 %v1441, 0.0
    %v1579 = vmax.f32 %v1444, 0.0
    %v1580 = vmax.f32 %v1446, 0.0
    %v1581 = vmax.f32 %v1449, 0.0
    %v1582 = vmax.f32 %v1451, 0.0
    %v1583 = vmax.f32 %v1454, 0.0
    %v1584 = vmax.f32 %v1456, 0.0
    %v1585 = vmax.f32 %v1459, 0.0
    %v1586 = vmax.f32 %v1461, 0.0
    %v1587 = vmax.f32 %v1464, 0.0
    %v1588 = vmax.f32 %v1466, 0.0
    %v1589 = vmax.f32 %v1469, 0.0
    %v1590 = vmax.f32 %v1471, 0.0
    %v1591 = vmax.f32 %v1474, 0.0
    %v1592 = vmax.f32 %v1476, 0.0
    %v1593 = vmax.f32 %v1479, 0.0
    %v1594 = vmax.f32 %v1481, 0.0
    %v1595 = vmax.f32 %v1484, 0.0
    %v1596 = vmax.f32 %v1486, 0.0
    %v1597 = vmax.f32 %v1489, 0.0
    %v1598 = vmax.f32 %v1491, 0.0
    %v1599 = vmax.f32 %v1494, 0.0
    %v1600 = vmax.f32 %v1496, 0.0
    %v1601 = vmax.f32 %v1499, 0.0
    %v1602 = vmax.f32 %v1501, 0.0
    %v1603 = vmax.f32 %v1504, 0.0
    %v1604 = vmax.f32 %v1506, 0.0
    %v1605 = vmax.f32 %v1509, 0.0
    %v1606 = vmax.f32 %v1511, 0.0
    %v1607 = vmax.f32 %v1514, 0.0
    %v1608 = vmax.f32 %v1516, 0.0
    %v1609 = vmax.f32 %v1519, 0.0
    %v1610 = vmax.f32 %v1521, 0.0
    %v1611 = vmax.f32 %v1524, 0.0
    %v1612 = vmax.f32 %v1526, 0.0
    %v1613 = vmax.f32 %v1529, 0.0
    %v1614 = vmax.f32 %v1531, 0.0
    %v1615 = vmax.f32 %v1534, 0.0
    %v1616 = vmax.f32 %v1536, 0.0
    %v1617 = vmax.f32 %v1539, 0.0
    %v1618 = vmax.f32 %v1541, 0.0
    %v1619 = vmax.f32 %v1544, 0.0
    %v1620 = vmax.f32 %v1546, 0.0
    %v1621 = vmax.f32 %v1549, 0.0
    %v1622 = vmax.f32 %v1551, 0.0
    %v1623 = vmax.f32 %v1554, 0.0
    %v1624 = vmax.f32 %v1556, 0.0
    %v1625 = vmax.f32 %v1559, 0.0
    %v1626 = vmax.f32 %v1561, 0.0
    %v1627 = vpack.c.bf16 %v1564, %v1563
    %v1628 = vpack.c.bf16 %v1566, %v1565
    %v1629 = vpack.c.bf16 %v1568, %v1567
    %v1630 = vpack.c.bf16 %v1570, %v1569
    %v1631 = vpack.c.bf16 %v1572, %v1571
    %v1632 = vpack.c.bf16 %v1574, %v1573
    %v1633 = vpack.c.bf16 %v1576, %v1575
    %v1634 = vpack.c.bf16 %v1578, %v1577
    %v1635 = vpack.c.bf16 %v1580, %v1579
    %v1636 = vpack.c.bf16 %v1582, %v1581
    %v1637 = vpack.c.bf16 %v1584, %v1583
    %v1638 = vpack.c.bf16 %v1586, %v1585
    %v1639 = vpack.c.bf16 %v1588, %v1587
    %v1640 = vpack.c.bf16 %v1590, %v1589
    %v1641 = vpack.c.bf16 %v1592, %v1591
    %v1642 = vpack.c.bf16 %v1594, %v1593
    %v1643 = vpack.c.bf16 %v1596, %v1595
    %v1644 = vpack.c.bf16 %v1598, %v1597
    %v1645 = vpack.c.bf16 %v1600, %v1599
    %v1646 = vpack.c.bf16 %v1602, %v1601
    %v1647 = vpack.c.bf16 %v1604, %v1603
    %v1648 = vpack.c.bf16 %v1606, %v1605
    %v1649 = vpack.c.bf16 %v1608, %v1607
    %v1650 = vpack.c.bf16 %v1610, %v1609
    %v1651 = vpack.c.bf16 %v1612, %v1611
    %v1652 = vpack.c.bf16 %v1614, %v1613
    %v1653 = vpack.c.bf16 %v1616, %v1615
    %v1654 = vpack.c.bf16 %v1618, %v1617
    %v1655 = vpack.c.bf16 %v1620, %v1619
    %v1656 = vpack.c.bf16 %v1622, %v1621
    %v1657 = vpack.c.bf16 %v1624, %v1623
    %v1658 = vpack.c.bf16 %v1626, %v1625
    %s1659 = scalar_lea.vmem [#allocation2], 256
    %v1660 = vld [vmem:[%s1659] sm:$0xf]
    %v1661 = vld [vmem:[%s1659 + $0x4] sm:$0xf]
    %v1662 = vld [vmem:[%s1659 + $0x8] sm:$0xf]
    %v1663 = vld [vmem:[%s1659 + $0xc] sm:$0xf]
    %v1664 = vld [vmem:[%s1659 + $0x10] sm:$0xf]
    %v1665 = vld [vmem:[%s1659 + $0x14] sm:$0xf]
    %v1666 = vld [vmem:[%s1659 + $0x18] sm:$0xf]
    %v1667 = vld [vmem:[%s1659 + $0x1c] sm:$0xf]
    %v1668 = vld [vmem:[%s1659 + $0x20] sm:$0xf]
    %v1669 = vld [vmem:[%s1659 + $0x24] sm:$0xf]
    %v1670 = vld [vmem:[%s1659 + $0x28] sm:$0xf]
    %v1671 = vld [vmem:[%s1659 + $0x2c] sm:$0xf]
    %v1672 = vld [vmem:[%s1659 + $0x30] sm:$0xf]
    %v1673 = vld [vmem:[%s1659 + $0x34] sm:$0xf]
    %v1674 = vld [vmem:[%s1659 + $0x38] sm:$0xf]
    %v1675 = vld [vmem:[%s1659 + $0x3c] sm:$0xf]
    %s1676 = scalar_lea.vmem %s2, 4
    %v1677 = vld [vmem:[%s1676] sm:$0x1]
    %v1679 = vperm.slane %v1677, 0
    %v1697 = vunpack.c.l.b16 %v1660
    %v1698 = vunpack.c.l.b16 %v1661
    %v1699 = vunpack.c.l.b16 %v1662
    %v1700 = vunpack.c.l.b16 %v1663
    %v1701 = vunpack.c.l.b16 %v1664
    %v1702 = vunpack.c.l.b16 %v1665
    %v1703 = vunpack.c.l.b16 %v1666
    %v1704 = vunpack.c.l.b16 %v1667
    %v1705 = vunpack.c.l.b16 %v1668
    %v1706 = vunpack.c.l.b16 %v1669
    %v1707 = vunpack.c.l.b16 %v1670
    %v1708 = vunpack.c.l.b16 %v1671
    %v1709 = vunpack.c.l.b16 %v1672
    %v1710 = vunpack.c.l.b16 %v1673
    %v1711 = vunpack.c.l.b16 %v1674
    %v1712 = vunpack.c.l.b16 %v1675
    %v1713 = vpack.c.b16 %v1698, %v1697
    %v1714 = vpack.c.b16 %v1700, %v1699
    %v1715 = vpack.c.b16 %v1702, %v1701
    %v1716 = vpack.c.b16 %v1704, %v1703
    %v1717 = vpack.c.b16 %v1706, %v1705
    %v1718 = vpack.c.b16 %v1708, %v1707
    %v1719 = vpack.c.b16 %v1710, %v1709
    %v1720 = vpack.c.b16 %v1712, %v1711
    %1729 = vmatpush.bf16.msra.mxu0 %v1720
    %1730 = vmatpush.bf16.msra.mxu0 %v1719
    %1731 = vmatpush.bf16.msra.mxu0 %v1718
    %1732 = vmatpush.bf16.msra.mxu0 %v1717
    %1733 = vmatpush.bf16.msra.mxu0 %v1716
    %1734 = vmatpush.bf16.msra.mxu0 %v1715
    %1735 = vmatpush.bf16.msra.mxu0 %v1714
    %1736 = vmatpush.bf16.msra.mxu0 %v1713
    %1737 = vmatmul.bf16.gmra.mxu0 %v1627
    %v1738 = vpop.f32.mrf.mxu0
    %v1739 = vadd.f32 %v1679, %v1738
    %v1740 = vpop.f32.mrf.mxu0
    %v1741 = vadd.f32 %v1679, %v1740
    %1742 = vmatmul.bf16.gmra.mxu0 %v1628
    %v1743 = vpop.f32.mrf.mxu0
    %v1744 = vadd.f32 %v1679, %v1743
    %v1745 = vpop.f32.mrf.mxu0
    %v1746 = vadd.f32 %v1679, %v1745
    %1747 = vmatmul.bf16.gmra.mxu0 %v1629
    %v1748 = vpop.f32.mrf.mxu0
    %v1749 = vadd.f32 %v1679, %v1748
    %v1750 = vpop.f32.mrf.mxu0
    %v1751 = vadd.f32 %v1679, %v1750
    %1752 = vmatmul.bf16.gmra.mxu0 %v1630
    %v1753 = vpop.f32.mrf.mxu0
    %v1754 = vadd.f32 %v1679, %v1753
    %v1755 = vpop.f32.mrf.mxu0
    %v1756 = vadd.f32 %v1679, %v1755
    %1757 = vmatmul.bf16.gmra.mxu0 %v1631
    %v1758 = vpop.f32.mrf.mxu0
    %v1759 = vadd.f32 %v1679, %v1758
    %v1760 = vpop.f32.mrf.mxu0
    %v1761 = vadd.f32 %v1679, %v1760
    %1762 = vmatmul.bf16.gmra.mxu0 %v1632
    %v1763 = vpop.f32.mrf.mxu0
    %v1764 = vadd.f32 %v1679, %v1763
    %v1765 = vpop.f32.mrf.mxu0
    %v1766 = vadd.f32 %v1679, %v1765
    %1767 = vmatmul.bf16.gmra.mxu0 %v1633
    %v1768 = vpop.f32.mrf.mxu0
    %v1769 = vadd.f32 %v1679, %v1768
    %v1770 = vpop.f32.mrf.mxu0
    %v1771 = vadd.f32 %v1679, %v1770
    %1772 = vmatmul.bf16.gmra.mxu0 %v1634
    %v1773 = vpop.f32.mrf.mxu0
    %v1774 = vadd.f32 %v1679, %v1773
    %v1775 = vpop.f32.mrf.mxu0
    %v1776 = vadd.f32 %v1679, %v1775
    %1777 = vmatmul.bf16.gmra.mxu0 %v1635
    %v1778 = vpop.f32.mrf.mxu0
    %v1779 = vadd.f32 %v1679, %v1778
    %v1780 = vpop.f32.mrf.mxu0
    %v1781 = vadd.f32 %v1679, %v1780
    %1782 = vmatmul.bf16.gmra.mxu0 %v1636
    %v1783 = vpop.f32.mrf.mxu0
    %v1784 = vadd.f32 %v1679, %v1783
    %v1785 = vpop.f32.mrf.mxu0
    %v1786 = vadd.f32 %v1679, %v1785
    %1787 = vmatmul.bf16.gmra.mxu0 %v1637
    %v1788 = vpop.f32.mrf.mxu0
    %v1789 = vadd.f32 %v1679, %v1788
    %v1790 = vpop.f32.mrf.mxu0
    %v1791 = vadd.f32 %v1679, %v1790
    %1792 = vmatmul.bf16.gmra.mxu0 %v1638
    %v1793 = vpop.f32.mrf.mxu0
    %v1794 = vadd.f32 %v1679, %v1793
    %v1795 = vpop.f32.mrf.mxu0
    %v1796 = vadd.f32 %v1679, %v1795
    %1797 = vmatmul.bf16.gmra.mxu0 %v1639
    %v1798 = vpop.f32.mrf.mxu0
    %v1799 = vadd.f32 %v1679, %v1798
    %v1800 = vpop.f32.mrf.mxu0
    %v1801 = vadd.f32 %v1679, %v1800
    %1802 = vmatmul.bf16.gmra.mxu0 %v1640
    %v1803 = vpop.f32.mrf.mxu0
    %v1804 = vadd.f32 %v1679, %v1803
    %v1805 = vpop.f32.mrf.mxu0
    %v1806 = vadd.f32 %v1679, %v1805
    %1807 = vmatmul.bf16.gmra.mxu0 %v1641
    %v1808 = vpop.f32.mrf.mxu0
    %v1809 = vadd.f32 %v1679, %v1808
    %v1810 = vpop.f32.mrf.mxu0
    %v1811 = vadd.f32 %v1679, %v1810
    %1812 = vmatmul.bf16.gmra.mxu0 %v1642
    %v1813 = vpop.f32.mrf.mxu0
    %v1814 = vadd.f32 %v1679, %v1813
    %v1815 = vpop.f32.mrf.mxu0
    %v1816 = vadd.f32 %v1679, %v1815
    %1817 = vmatmul.bf16.gmra.mxu0 %v1643
    %v1818 = vpop.f32.mrf.mxu0
    %v1819 = vadd.f32 %v1679, %v1818
    %v1820 = vpop.f32.mrf.mxu0
    %v1821 = vadd.f32 %v1679, %v1820
    %1822 = vmatmul.bf16.gmra.mxu0 %v1644
    %v1823 = vpop.f32.mrf.mxu0
    %v1824 = vadd.f32 %v1679, %v1823
    %v1825 = vpop.f32.mrf.mxu0
    %v1826 = vadd.f32 %v1679, %v1825
    %1827 = vmatmul.bf16.gmra.mxu0 %v1645
    %v1828 = vpop.f32.mrf.mxu0
    %v1829 = vadd.f32 %v1679, %v1828
    %v1830 = vpop.f32.mrf.mxu0
    %v1831 = vadd.f32 %v1679, %v1830
    %1832 = vmatmul.bf16.gmra.mxu0 %v1646
    %v1833 = vpop.f32.mrf.mxu0
    %v1834 = vadd.f32 %v1679, %v1833
    %v1835 = vpop.f32.mrf.mxu0
    %v1836 = vadd.f32 %v1679, %v1835
    %1837 = vmatmul.bf16.gmra.mxu0 %v1647
    %v1838 = vpop.f32.mrf.mxu0
    %v1839 = vadd.f32 %v1679, %v1838
    %v1840 = vpop.f32.mrf.mxu0
    %v1841 = vadd.f32 %v1679, %v1840
    %1842 = vmatmul.bf16.gmra.mxu0 %v1648
    %v1843 = vpop.f32.mrf.mxu0
    %v1844 = vadd.f32 %v1679, %v1843
    %v1845 = vpop.f32.mrf.mxu0
    %v1846 = vadd.f32 %v1679, %v1845
    %1847 = vmatmul.bf16.gmra.mxu0 %v1649
    %v1848 = vpop.f32.mrf.mxu0
    %v1849 = vadd.f32 %v1679, %v1848
    %v1850 = vpop.f32.mrf.mxu0
    %v1851 = vadd.f32 %v1679, %v1850
    %1852 = vmatmul.bf16.gmra.mxu0 %v1650
    %v1853 = vpop.f32.mrf.mxu0
    %v1854 = vadd.f32 %v1679, %v1853
    %v1855 = vpop.f32.mrf.mxu0
    %v1856 = vadd.f32 %v1679, %v1855
    %1857 = vmatmul.bf16.gmra.mxu0 %v1651
    %v1858 = vpop.f32.mrf.mxu0
    %v1859 = vadd.f32 %v1679, %v1858
    %v1860 = vpop.f32.mrf.mxu0
    %v1861 = vadd.f32 %v1679, %v1860
    %1862 = vmatmul.bf16.gmra.mxu0 %v1652
    %v1863 = vpop.f32.mrf.mxu0
    %v1864 = vadd.f32 %v1679, %v1863
    %v1865 = vpop.f32.mrf.mxu0
    %v1866 = vadd.f32 %v1679, %v1865
    %1867 = vmatmul.bf16.gmra.mxu0 %v1653
    %v1868 = vpop.f32.mrf.mxu0
    %v1869 = vadd.f32 %v1679, %v1868
    %v1870 = vpop.f32.mrf.mxu0
    %v1871 = vadd.f32 %v1679, %v1870
    %1872 = vmatmul.bf16.gmra.mxu0 %v1654
    %v1873 = vpop.f32.mrf.mxu0
    %v1874 = vadd.f32 %v1679, %v1873
    %v1875 = vpop.f32.mrf.mxu0
    %v1876 = vadd.f32 %v1679, %v1875
    %1877 = vmatmul.bf16.gmra.mxu0 %v1655
    %v1878 = vpop.f32.mrf.mxu0
    %v1879 = vadd.f32 %v1679, %v1878
    %v1880 = vpop.f32.mrf.mxu0
    %v1881 = vadd.f32 %v1679, %v1880
    %1882 = vmatmul.bf16.gmra.mxu0 %v1656
    %v1883 = vpop.f32.mrf.mxu0
    %v1884 = vadd.f32 %v1679, %v1883
    %v1885 = vpop.f32.mrf.mxu0
    %v1886 = vadd.f32 %v1679, %v1885
    %1887 = vmatmul.bf16.gmra.mxu0 %v1657
    %v1888 = vpop.f32.mrf.mxu0
    %v1889 = vadd.f32 %v1679, %v1888
    %v1890 = vpop.f32.mrf.mxu0
    %v1891 = vadd.f32 %v1679, %v1890
    %1892 = vmatmul.bf16.gmra.mxu0 %v1658
    %v1893 = vpop.f32.mrf.mxu0
    %v1894 = vadd.f32 %v1679, %v1893
    %v1895 = vpop.f32.mrf.mxu0
    %v1896 = vadd.f32 %v1679, %v1895
    %1897 = vdwg.mxu0
    %v1898 = vmax.f32 %v1739, 0.0
    %v1899 = vmax.f32 %v1741, 0.0
    %v1900 = vmax.f32 %v1744, 0.0
    %v1901 = vmax.f32 %v1746, 0.0
    %v1902 = vmax.f32 %v1749, 0.0
    %v1903 = vmax.f32 %v1751, 0.0
    %v1904 = vmax.f32 %v1754, 0.0
    %v1905 = vmax.f32 %v1756, 0.0
    %v1906 = vmax.f32 %v1759, 0.0
    %v1907 = vmax.f32 %v1761, 0.0
    %v1908 = vmax.f32 %v1764, 0.0
    %v1909 = vmax.f32 %v1766, 0.0
    %v1910 = vmax.f32 %v1769, 0.0
    %v1911 = vmax.f32 %v1771, 0.0
    %v1912 = vmax.f32 %v1774, 0.0
    %v1913 = vmax.f32 %v1776, 0.0
    %v1914 = vmax.f32 %v1779, 0.0
    %v1915 = vmax.f32 %v1781, 0.0
    %v1916 = vmax.f32 %v1784, 0.0
    %v1917 = vmax.f32 %v1786, 0.0
    %v1918 = vmax.f32 %v1789, 0.0
    %v1919 = vmax.f32 %v1791, 0.0
    %v1920 = vmax.f32 %v1794, 0.0
    %v1921 = vmax.f32 %v1796, 0.0
    %v1922 = vmax.f32 %v1799, 0.0
    %v1923 = vmax.f32 %v1801, 0.0
    %v1924 = vmax.f32 %v1804, 0.0
    %v1925 = vmax.f32 %v1806, 0.0
    %v1926 = vmax.f32 %v1809, 0.0
    %v1927 = vmax.f32 %v1811, 0.0
    %v1928 = vmax.f32 %v1814, 0.0
    %v1929 = vmax.f32 %v1816, 0.0
    %v1930 = vmax.f32 %v1819, 0.0
    %v1931 = vmax.f32 %v1821, 0.0
    %v1932 = vmax.f32 %v1824, 0.0
    %v1933 = vmax.f32 %v1826, 0.0
    %v1934 = vmax.f32 %v1829, 0.0
    %v1935 = vmax.f32 %v1831, 0.0
    %v1936 = vmax.f32 %v1834, 0.0
    %v1937 = vmax.f32 %v1836, 0.0
    %v1938 = vmax.f32 %v1839, 0.0
    %v1939 = vmax.f32 %v1841, 0.0
    %v1940 = vmax.f32 %v1844, 0.0
    %v1941 = vmax.f32 %v1846, 0.0
    %v1942 = vmax.f32 %v1849, 0.0
    %v1943 = vmax.f32 %v1851, 0.0
    %v1944 = vmax.f32 %v1854, 0.0
    %v1945 = vmax.f32 %v1856, 0.0
    %v1946 = vmax.f32 %v1859, 0.0
    %v1947 = vmax.f32 %v1861, 0.0
    %v1948 = vmax.f32 %v1864, 0.0
    %v1949 = vmax.f32 %v1866, 0.0
    %v1950 = vmax.f32 %v1869, 0.0
    %v1951 = vmax.f32 %v1871, 0.0
    %v1952 = vmax.f32 %v1874, 0.0
    %v1953 = vmax.f32 %v1876, 0.0
    %v1954 = vmax.f32 %v1879, 0.0
    %v1955 = vmax.f32 %v1881, 0.0
    %v1956 = vmax.f32 %v1884, 0.0
    %v1957 = vmax.f32 %v1886, 0.0
    %v1958 = vmax.f32 %v1889, 0.0
    %v1959 = vmax.f32 %v1891, 0.0
    %v1960 = vmax.f32 %v1894, 0.0
    %v1961 = vmax.f32 %v1896, 0.0
    %v1962 = vpack.c.bf16 %v1899, %v1898
    %v1963 = vpack.c.bf16 %v1901, %v1900
    %v1964 = vpack.c.bf16 %v1903, %v1902
    %v1965 = vpack.c.bf16 %v1905, %v1904
    %v1966 = vpack.c.bf16 %v1907, %v1906
    %v1967 = vpack.c.bf16 %v1909, %v1908
    %v1968 = vpack.c.bf16 %v1911, %v1910
    %v1969 = vpack.c.bf16 %v1913, %v1912
    %v1970 = vpack.c.bf16 %v1915, %v1914
    %v1971 = vpack.c.bf16 %v1917, %v1916
    %v1972 = vpack.c.bf16 %v1919, %v1918
    %v1973 = vpack.c.bf16 %v1921, %v1920
    %v1974 = vpack.c.bf16 %v1923, %v1922
    %v1975 = vpack.c.bf16 %v1925, %v1924
    %v1976 = vpack.c.bf16 %v1927, %v1926
    %v1977 = vpack.c.bf16 %v1929, %v1928
    %v1978 = vpack.c.bf16 %v1931, %v1930
    %v1979 = vpack.c.bf16 %v1933, %v1932
    %v1980 = vpack.c.bf16 %v1935, %v1934
    %v1981 = vpack.c.bf16 %v1937, %v1936
    %v1982 = vpack.c.bf16 %v1939, %v1938
    %v1983 = vpack.c.bf16 %v1941, %v1940
    %v1984 = vpack.c.bf16 %v1943, %v1942
    %v1985 = vpack.c.bf16 %v1945, %v1944
    %v1986 = vpack.c.bf16 %v1947, %v1946
    %v1987 = vpack.c.bf16 %v1949, %v1948
    %v1988 = vpack.c.bf16 %v1951, %v1950
    %v1989 = vpack.c.bf16 %v1953, %v1952
    %v1990 = vpack.c.bf16 %v1955, %v1954
    %v1991 = vpack.c.bf16 %v1957, %v1956
    %v1992 = vpack.c.bf16 %v1959, %v1958
    %v1993 = vpack.c.bf16 %v1961, %v1960
    %s1994 = scalar_lea.vmem [#allocation2], 320
    %v1995 = vld [vmem:[%s1994] sm:$0xf]
    %v1996 = vld [vmem:[%s1994 + $0x4] sm:$0xf]
    %v1997 = vld [vmem:[%s1994 + $0x8] sm:$0xf]
    %v1998 = vld [vmem:[%s1994 + $0xc] sm:$0xf]
    %v1999 = vld [vmem:[%s1994 + $0x10] sm:$0xf]
    %v2000 = vld [vmem:[%s1994 + $0x14] sm:$0xf]
    %v2001 = vld [vmem:[%s1994 + $0x18] sm:$0xf]
    %v2002 = vld [vmem:[%s1994 + $0x1c] sm:$0xf]
    %v2003 = vld [vmem:[%s1994 + $0x20] sm:$0xf]
    %v2004 = vld [vmem:[%s1994 + $0x24] sm:$0xf]
    %v2005 = vld [vmem:[%s1994 + $0x28] sm:$0xf]
    %v2006 = vld [vmem:[%s1994 + $0x2c] sm:$0xf]
    %v2007 = vld [vmem:[%s1994 + $0x30] sm:$0xf]
    %v2008 = vld [vmem:[%s1994 + $0x34] sm:$0xf]
    %v2009 = vld [vmem:[%s1994 + $0x38] sm:$0xf]
    %v2010 = vld [vmem:[%s1994 + $0x3c] sm:$0xf]
    %s2011 = scalar_lea.vmem %s2, 5
    %v2012 = vld [vmem:[%s2011] sm:$0x1]
    %v2014 = vperm.slane %v2012, 0
    %v2032 = vunpack.c.l.b16 %v1995
    %v2033 = vunpack.c.l.b16 %v1996
    %v2034 = vunpack.c.l.b16 %v1997
    %v2035 = vunpack.c.l.b16 %v1998
    %v2036 = vunpack.c.l.b16 %v1999
    %v2037 = vunpack.c.l.b16 %v2000
    %v2038 = vunpack.c.l.b16 %v2001
    %v2039 = vunpack.c.l.b16 %v2002
    %v2040 = vunpack.c.l.b16 %v2003
    %v2041 = vunpack.c.l.b16 %v2004
    %v2042 = vunpack.c.l.b16 %v2005
    %v2043 = vunpack.c.l.b16 %v2006
    %v2044 = vunpack.c.l.b16 %v2007
    %v2045 = vunpack.c.l.b16 %v2008
    %v2046 = vunpack.c.l.b16 %v2009
    %v2047 = vunpack.c.l.b16 %v2010
    %v2048 = vpack.c.b16 %v2033, %v2032
    %v2049 = vpack.c.b16 %v2035, %v2034
    %v2050 = vpack.c.b16 %v2037, %v2036
    %v2051 = vpack.c.b16 %v2039, %v2038
    %v2052 = vpack.c.b16 %v2041, %v2040
    %v2053 = vpack.c.b16 %v2043, %v2042
    %v2054 = vpack.c.b16 %v2045, %v2044
    %v2055 = vpack.c.b16 %v2047, %v2046
    %2064 = vmatpush.bf16.msra.mxu0 %v2055
    %2065 = vmatpush.bf16.msra.mxu0 %v2054
    %2066 = vmatpush.bf16.msra.mxu0 %v2053
    %2067 = vmatpush.bf16.msra.mxu0 %v2052
    %2068 = vmatpush.bf16.msra.mxu0 %v2051
    %2069 = vmatpush.bf16.msra.mxu0 %v2050
    %2070 = vmatpush.bf16.msra.mxu0 %v2049
    %2071 = vmatpush.bf16.msra.mxu0 %v2048
    %2072 = vmatmul.bf16.gmra.mxu0 %v1962
    %v2073 = vpop.f32.mrf.mxu0
    %v2074 = vadd.f32 %v2014, %v2073
    %v2075 = vpop.f32.mrf.mxu0
    %v2076 = vadd.f32 %v2014, %v2075
    %2077 = vmatmul.bf16.gmra.mxu0 %v1963
    %v2078 = vpop.f32.mrf.mxu0
    %v2079 = vadd.f32 %v2014, %v2078
    %v2080 = vpop.f32.mrf.mxu0
    %v2081 = vadd.f32 %v2014, %v2080
    %2082 = vmatmul.bf16.gmra.mxu0 %v1964
    %v2083 = vpop.f32.mrf.mxu0
    %v2084 = vadd.f32 %v2014, %v2083
    %v2085 = vpop.f32.mrf.mxu0
    %v2086 = vadd.f32 %v2014, %v2085
    %2087 = vmatmul.bf16.gmra.mxu0 %v1965
    %v2088 = vpop.f32.mrf.mxu0
    %v2089 = vadd.f32 %v2014, %v2088
    %v2090 = vpop.f32.mrf.mxu0
    %v2091 = vadd.f32 %v2014, %v2090
    %2092 = vmatmul.bf16.gmra.mxu0 %v1966
    %v2093 = vpop.f32.mrf.mxu0
    %v2094 = vadd.f32 %v2014, %v2093
    %v2095 = vpop.f32.mrf.mxu0
    %v2096 = vadd.f32 %v2014, %v2095
    %2097 = vmatmul.bf16.gmra.mxu0 %v1967
    %v2098 = vpop.f32.mrf.mxu0
    %v2099 = vadd.f32 %v2014, %v2098
    %v2100 = vpop.f32.mrf.mxu0
    %v2101 = vadd.f32 %v2014, %v2100
    %2102 = vmatmul.bf16.gmra.mxu0 %v1968
    %v2103 = vpop.f32.mrf.mxu0
    %v2104 = vadd.f32 %v2014, %v2103
    %v2105 = vpop.f32.mrf.mxu0
    %v2106 = vadd.f32 %v2014, %v2105
    %2107 = vmatmul.bf16.gmra.mxu0 %v1969
    %v2108 = vpop.f32.mrf.mxu0
    %v2109 = vadd.f32 %v2014, %v2108
    %v2110 = vpop.f32.mrf.mxu0
    %v2111 = vadd.f32 %v2014, %v2110
    %2112 = vmatmul.bf16.gmra.mxu0 %v1970
    %v2113 = vpop.f32.mrf.mxu0
    %v2114 = vadd.f32 %v2014, %v2113
    %v2115 = vpop.f32.mrf.mxu0
    %v2116 = vadd.f32 %v2014, %v2115
    %2117 = vmatmul.bf16.gmra.mxu0 %v1971
    %v2118 = vpop.f32.mrf.mxu0
    %v2119 = vadd.f32 %v2014, %v2118
    %v2120 = vpop.f32.mrf.mxu0
    %v2121 = vadd.f32 %v2014, %v2120
    %2122 = vmatmul.bf16.gmra.mxu0 %v1972
    %v2123 = vpop.f32.mrf.mxu0
    %v2124 = vadd.f32 %v2014, %v2123
    %v2125 = vpop.f32.mrf.mxu0
    %v2126 = vadd.f32 %v2014, %v2125
    %2127 = vmatmul.bf16.gmra.mxu0 %v1973
    %v2128 = vpop.f32.mrf.mxu0
    %v2129 = vadd.f32 %v2014, %v2128
    %v2130 = vpop.f32.mrf.mxu0
    %v2131 = vadd.f32 %v2014, %v2130
    %2132 = vmatmul.bf16.gmra.mxu0 %v1974
    %v2133 = vpop.f32.mrf.mxu0
    %v2134 = vadd.f32 %v2014, %v2133
    %v2135 = vpop.f32.mrf.mxu0
    %v2136 = vadd.f32 %v2014, %v2135
    %2137 = vmatmul.bf16.gmra.mxu0 %v1975
    %v2138 = vpop.f32.mrf.mxu0
    %v2139 = vadd.f32 %v2014, %v2138
    %v2140 = vpop.f32.mrf.mxu0
    %v2141 = vadd.f32 %v2014, %v2140
    %2142 = vmatmul.bf16.gmra.mxu0 %v1976
    %v2143 = vpop.f32.mrf.mxu0
    %v2144 = vadd.f32 %v2014, %v2143
    %v2145 = vpop.f32.mrf.mxu0
    %v2146 = vadd.f32 %v2014, %v2145
    %2147 = vmatmul.bf16.gmra.mxu0 %v1977
    %v2148 = vpop.f32.mrf.mxu0
    %v2149 = vadd.f32 %v2014, %v2148
    %v2150 = vpop.f32.mrf.mxu0
    %v2151 = vadd.f32 %v2014, %v2150
    %2152 = vmatmul.bf16.gmra.mxu0 %v1978
    %v2153 = vpop.f32.mrf.mxu0
    %v2154 = vadd.f32 %v2014, %v2153
    %v2155 = vpop.f32.mrf.mxu0
    %v2156 = vadd.f32 %v2014, %v2155
    %2157 = vmatmul.bf16.gmra.mxu0 %v1979
    %v2158 = vpop.f32.mrf.mxu0
    %v2159 = vadd.f32 %v2014, %v2158
    %v2160 = vpop.f32.mrf.mxu0
    %v2161 = vadd.f32 %v2014, %v2160
    %2162 = vmatmul.bf16.gmra.mxu0 %v1980
    %v2163 = vpop.f32.mrf.mxu0
    %v2164 = vadd.f32 %v2014, %v2163
    %v2165 = vpop.f32.mrf.mxu0
    %v2166 = vadd.f32 %v2014, %v2165
    %2167 = vmatmul.bf16.gmra.mxu0 %v1981
    %v2168 = vpop.f32.mrf.mxu0
    %v2169 = vadd.f32 %v2014, %v2168
    %v2170 = vpop.f32.mrf.mxu0
    %v2171 = vadd.f32 %v2014, %v2170
    %2172 = vmatmul.bf16.gmra.mxu0 %v1982
    %v2173 = vpop.f32.mrf.mxu0
    %v2174 = vadd.f32 %v2014, %v2173
    %v2175 = vpop.f32.mrf.mxu0
    %v2176 = vadd.f32 %v2014, %v2175
    %2177 = vmatmul.bf16.gmra.mxu0 %v1983
    %v2178 = vpop.f32.mrf.mxu0
    %v2179 = vadd.f32 %v2014, %v2178
    %v2180 = vpop.f32.mrf.mxu0
    %v2181 = vadd.f32 %v2014, %v2180
    %2182 = vmatmul.bf16.gmra.mxu0 %v1984
    %v2183 = vpop.f32.mrf.mxu0
    %v2184 = vadd.f32 %v2014, %v2183
    %v2185 = vpop.f32.mrf.mxu0
    %v2186 = vadd.f32 %v2014, %v2185
    %2187 = vmatmul.bf16.gmra.mxu0 %v1985
    %v2188 = vpop.f32.mrf.mxu0
    %v2189 = vadd.f32 %v2014, %v2188
    %v2190 = vpop.f32.mrf.mxu0
    %v2191 = vadd.f32 %v2014, %v2190
    %2192 = vmatmul.bf16.gmra.mxu0 %v1986
    %v2193 = vpop.f32.mrf.mxu0
    %v2194 = vadd.f32 %v2014, %v2193
    %v2195 = vpop.f32.mrf.mxu0
    %v2196 = vadd.f32 %v2014, %v2195
    %2197 = vmatmul.bf16.gmra.mxu0 %v1987
    %v2198 = vpop.f32.mrf.mxu0
    %v2199 = vadd.f32 %v2014, %v2198
    %v2200 = vpop.f32.mrf.mxu0
    %v2201 = vadd.f32 %v2014, %v2200
    %2202 = vmatmul.bf16.gmra.mxu0 %v1988
    %v2203 = vpop.f32.mrf.mxu0
    %v2204 = vadd.f32 %v2014, %v2203
    %v2205 = vpop.f32.mrf.mxu0
    %v2206 = vadd.f32 %v2014, %v2205
    %2207 = vmatmul.bf16.gmra.mxu0 %v1989
    %v2208 = vpop.f32.mrf.mxu0
    %v2209 = vadd.f32 %v2014, %v2208
    %v2210 = vpop.f32.mrf.mxu0
    %v2211 = vadd.f32 %v2014, %v2210
    %2212 = vmatmul.bf16.gmra.mxu0 %v1990
    %v2213 = vpop.f32.mrf.mxu0
    %v2214 = vadd.f32 %v2014, %v2213
    %v2215 = vpop.f32.mrf.mxu0
    %v2216 = vadd.f32 %v2014, %v2215
    %2217 = vmatmul.bf16.gmra.mxu0 %v1991
    %v2218 = vpop.f32.mrf.mxu0
    %v2219 = vadd.f32 %v2014, %v2218
    %v2220 = vpop.f32.mrf.mxu0
    %v2221 = vadd.f32 %v2014, %v2220
    %2222 = vmatmul.bf16.gmra.mxu0 %v1992
    %v2223 = vpop.f32.mrf.mxu0
    %v2224 = vadd.f32 %v2014, %v2223
    %v2225 = vpop.f32.mrf.mxu0
    %v2226 = vadd.f32 %v2014, %v2225
    %2227 = vmatmul.bf16.gmra.mxu0 %v1993
    %v2228 = vpop.f32.mrf.mxu0
    %v2229 = vadd.f32 %v2014, %v2228
    %v2230 = vpop.f32.mrf.mxu0
    %v2231 = vadd.f32 %v2014, %v2230
    %2232 = vdwg.mxu0
    %v2233 = vmax.f32 %v2074, 0.0
    %v2234 = vmax.f32 %v2076, 0.0
    %v2235 = vmax.f32 %v2079, 0.0
    %v2236 = vmax.f32 %v2081, 0.0
    %v2237 = vmax.f32 %v2084, 0.0
    %v2238 = vmax.f32 %v2086, 0.0
    %v2239 = vmax.f32 %v2089, 0.0
    %v2240 = vmax.f32 %v2091, 0.0
    %v2241 = vmax.f32 %v2094, 0.0
    %v2242 = vmax.f32 %v2096, 0.0
    %v2243 = vmax.f32 %v2099, 0.0
    %v2244 = vmax.f32 %v2101, 0.0
    %v2245 = vmax.f32 %v2104, 0.0
    %v2246 = vmax.f32 %v2106, 0.0
    %v2247 = vmax.f32 %v2109, 0.0
    %v2248 = vmax.f32 %v2111, 0.0
    %v2249 = vmax.f32 %v2114, 0.0
    %v2250 = vmax.f32 %v2116, 0.0
    %v2251 = vmax.f32 %v2119, 0.0
    %v2252 = vmax.f32 %v2121, 0.0
    %v2253 = vmax.f32 %v2124, 0.0
    %v2254 = vmax.f32 %v2126, 0.0
    %v2255 = vmax.f32 %v2129, 0.0
    %v2256 = vmax.f32 %v2131, 0.0
    %v2257 = vmax.f32 %v2134, 0.0
    %v2258 = vmax.f32 %v2136, 0.0
    %v2259 = vmax.f32 %v2139, 0.0
    %v2260 = vmax.f32 %v2141, 0.0
    %v2261 = vmax.f32 %v2144, 0.0
    %v2262 = vmax.f32 %v2146, 0.0
    %v2263 = vmax.f32 %v2149, 0.0
    %v2264 = vmax.f32 %v2151, 0.0
    %v2265 = vmax.f32 %v2154, 0.0
    %v2266 = vmax.f32 %v2156, 0.0
    %v2267 = vmax.f32 %v2159, 0.0
    %v2268 = vmax.f32 %v2161, 0.0
    %v2269 = vmax.f32 %v2164, 0.0
    %v2270 = vmax.f32 %v2166, 0.0
    %v2271 = vmax.f32 %v2169, 0.0
    %v2272 = vmax.f32 %v2171, 0.0
    %v2273 = vmax.f32 %v2174, 0.0
    %v2274 = vmax.f32 %v2176, 0.0
    %v2275 = vmax.f32 %v2179, 0.0
    %v2276 = vmax.f32 %v2181, 0.0
    %v2277 = vmax.f32 %v2184, 0.0
    %v2278 = vmax.f32 %v2186, 0.0
    %v2279 = vmax.f32 %v2189, 0.0
    %v2280 = vmax.f32 %v2191, 0.0
    %v2281 = vmax.f32 %v2194, 0.0
    %v2282 = vmax.f32 %v2196, 0.0
    %v2283 = vmax.f32 %v2199, 0.0
    %v2284 = vmax.f32 %v2201, 0.0
    %v2285 = vmax.f32 %v2204, 0.0
    %v2286 = vmax.f32 %v2206, 0.0
    %v2287 = vmax.f32 %v2209, 0.0
    %v2288 = vmax.f32 %v2211, 0.0
    %v2289 = vmax.f32 %v2214, 0.0
    %v2290 = vmax.f32 %v2216, 0.0
    %v2291 = vmax.f32 %v2219, 0.0
    %v2292 = vmax.f32 %v2221, 0.0
    %v2293 = vmax.f32 %v2224, 0.0
    %v2294 = vmax.f32 %v2226, 0.0
    %v2295 = vmax.f32 %v2229, 0.0
    %v2296 = vmax.f32 %v2231, 0.0
    %v2297 = vpack.c.bf16 %v2234, %v2233
    %v2298 = vpack.c.bf16 %v2236, %v2235
    %v2299 = vpack.c.bf16 %v2238, %v2237
    %v2300 = vpack.c.bf16 %v2240, %v2239
    %v2301 = vpack.c.bf16 %v2242, %v2241
    %v2302 = vpack.c.bf16 %v2244, %v2243
    %v2303 = vpack.c.bf16 %v2246, %v2245
    %v2304 = vpack.c.bf16 %v2248, %v2247
    %v2305 = vpack.c.bf16 %v2250, %v2249
    %v2306 = vpack.c.bf16 %v2252, %v2251
    %v2307 = vpack.c.bf16 %v2254, %v2253
    %v2308 = vpack.c.bf16 %v2256, %v2255
    %v2309 = vpack.c.bf16 %v2258, %v2257
    %v2310 = vpack.c.bf16 %v2260, %v2259
    %v2311 = vpack.c.bf16 %v2262, %v2261
    %v2312 = vpack.c.bf16 %v2264, %v2263
    %v2313 = vpack.c.bf16 %v2266, %v2265
    %v2314 = vpack.c.bf16 %v2268, %v2267
    %v2315 = vpack.c.bf16 %v2270, %v2269
    %v2316 = vpack.c.bf16 %v2272, %v2271
    %v2317 = vpack.c.bf16 %v2274, %v2273
    %v2318 = vpack.c.bf16 %v2276, %v2275
    %v2319 = vpack.c.bf16 %v2278, %v2277
    %v2320 = vpack.c.bf16 %v2280, %v2279
    %v2321 = vpack.c.bf16 %v2282, %v2281
    %v2322 = vpack.c.bf16 %v2284, %v2283
    %v2323 = vpack.c.bf16 %v2286, %v2285
    %v2324 = vpack.c.bf16 %v2288, %v2287
    %v2325 = vpack.c.bf16 %v2290, %v2289
    %v2326 = vpack.c.bf16 %v2292, %v2291
    %v2327 = vpack.c.bf16 %v2294, %v2293
    %v2328 = vpack.c.bf16 %v2296, %v2295
    %s2329 = scalar_lea.vmem [#allocation2], 384
    %v2330 = vld [vmem:[%s2329] sm:$0xf]
    %v2331 = vld [vmem:[%s2329 + $0x4] sm:$0xf]
    %v2332 = vld [vmem:[%s2329 + $0x8] sm:$0xf]
    %v2333 = vld [vmem:[%s2329 + $0xc] sm:$0xf]
    %v2334 = vld [vmem:[%s2329 + $0x10] sm:$0xf]
    %v2335 = vld [vmem:[%s2329 + $0x14] sm:$0xf]
    %v2336 = vld [vmem:[%s2329 + $0x18] sm:$0xf]
    %v2337 = vld [vmem:[%s2329 + $0x1c] sm:$0xf]
    %v2338 = vld [vmem:[%s2329 + $0x20] sm:$0xf]
    %v2339 = vld [vmem:[%s2329 + $0x24] sm:$0xf]
    %v2340 = vld [vmem:[%s2329 + $0x28] sm:$0xf]
    %v2341 = vld [vmem:[%s2329 + $0x2c] sm:$0xf]
    %v2342 = vld [vmem:[%s2329 + $0x30] sm:$0xf]
    %v2343 = vld [vmem:[%s2329 + $0x34] sm:$0xf]
    %v2344 = vld [vmem:[%s2329 + $0x38] sm:$0xf]
    %v2345 = vld [vmem:[%s2329 + $0x3c] sm:$0xf]
    %s2346 = scalar_lea.vmem %s2, 6
    %v2347 = vld [vmem:[%s2346] sm:$0x1]
    %v2349 = vperm.slane %v2347, 0
    %v2367 = vunpack.c.l.b16 %v2330
    %v2368 = vunpack.c.l.b16 %v2331
    %v2369 = vunpack.c.l.b16 %v2332
    %v2370 = vunpack.c.l.b16 %v2333
    %v2371 = vunpack.c.l.b16 %v2334
    %v2372 = vunpack.c.l.b16 %v2335
    %v2373 = vunpack.c.l.b16 %v2336
    %v2374 = vunpack.c.l.b16 %v2337
    %v2375 = vunpack.c.l.b16 %v2338
    %v2376 = vunpack.c.l.b16 %v2339
    %v2377 = vunpack.c.l.b16 %v2340
    %v2378 = vunpack.c.l.b16 %v2341
    %v2379 = vunpack.c.l.b16 %v2342
    %v2380 = vunpack.c.l.b16 %v2343
    %v2381 = vunpack.c.l.b16 %v2344
    %v2382 = vunpack.c.l.b16 %v2345
    %v2383 = vpack.c.b16 %v2368, %v2367
    %v2384 = vpack.c.b16 %v2370, %v2369
    %v2385 = vpack.c.b16 %v2372, %v2371
    %v2386 = vpack.c.b16 %v2374, %v2373
    %v2387 = vpack.c.b16 %v2376, %v2375
    %v2388 = vpack.c.b16 %v2378, %v2377
    %v2389 = vpack.c.b16 %v2380, %v2379
    %v2390 = vpack.c.b16 %v2382, %v2381
    %2399 = vmatpush.bf16.msra.mxu0 %v2390
    %2400 = vmatpush.bf16.msra.mxu0 %v2389
    %2401 = vmatpush.bf16.msra.mxu0 %v2388
    %2402 = vmatpush.bf16.msra.mxu0 %v2387
    %2403 = vmatpush.bf16.msra.mxu0 %v2386
    %2404 = vmatpush.bf16.msra.mxu0 %v2385
    %2405 = vmatpush.bf16.msra.mxu0 %v2384
    %2406 = vmatpush.bf16.msra.mxu0 %v2383
    %2407 = vmatmul.bf16.gmra.mxu0 %v2297
    %v2408 = vpop.f32.mrf.mxu0
    %v2409 = vadd.f32 %v2349, %v2408
    %v2410 = vpop.f32.mrf.mxu0
    %v2411 = vadd.f32 %v2349, %v2410
    %2412 = vmatmul.bf16.gmra.mxu0 %v2298
    %v2413 = vpop.f32.mrf.mxu0
    %v2414 = vadd.f32 %v2349, %v2413
    %v2415 = vpop.f32.mrf.mxu0
    %v2416 = vadd.f32 %v2349, %v2415
    %2417 = vmatmul.bf16.gmra.mxu0 %v2299
    %v2418 = vpop.f32.mrf.mxu0
    %v2419 = vadd.f32 %v2349, %v2418
    %v2420 = vpop.f32.mrf.mxu0
    %v2421 = vadd.f32 %v2349, %v2420
    %2422 = vmatmul.bf16.gmra.mxu0 %v2300
    %v2423 = vpop.f32.mrf.mxu0
    %v2424 = vadd.f32 %v2349, %v2423
    %v2425 = vpop.f32.mrf.mxu0
    %v2426 = vadd.f32 %v2349, %v2425
    %2427 = vmatmul.bf16.gmra.mxu0 %v2301
    %v2428 = vpop.f32.mrf.mxu0
    %v2429 = vadd.f32 %v2349, %v2428
    %v2430 = vpop.f32.mrf.mxu0
    %v2431 = vadd.f32 %v2349, %v2430
    %2432 = vmatmul.bf16.gmra.mxu0 %v2302
    %v2433 = vpop.f32.mrf.mxu0
    %v2434 = vadd.f32 %v2349, %v2433
    %v2435 = vpop.f32.mrf.mxu0
    %v2436 = vadd.f32 %v2349, %v2435
    %2437 = vmatmul.bf16.gmra.mxu0 %v2303
    %v2438 = vpop.f32.mrf.mxu0
    %v2439 = vadd.f32 %v2349, %v2438
    %v2440 = vpop.f32.mrf.mxu0
    %v2441 = vadd.f32 %v2349, %v2440
    %2442 = vmatmul.bf16.gmra.mxu0 %v2304
    %v2443 = vpop.f32.mrf.mxu0
    %v2444 = vadd.f32 %v2349, %v2443
    %v2445 = vpop.f32.mrf.mxu0
    %v2446 = vadd.f32 %v2349, %v2445
    %2447 = vmatmul.bf16.gmra.mxu0 %v2305
    %v2448 = vpop.f32.mrf.mxu0
    %v2449 = vadd.f32 %v2349, %v2448
    %v2450 = vpop.f32.mrf.mxu0
    %v2451 = vadd.f32 %v2349, %v2450
    %2452 = vmatmul.bf16.gmra.mxu0 %v2306
    %v2453 = vpop.f32.mrf.mxu0
    %v2454 = vadd.f32 %v2349, %v2453
    %v2455 = vpop.f32.mrf.mxu0
    %v2456 = vadd.f32 %v2349, %v2455
    %2457 = vmatmul.bf16.gmra.mxu0 %v2307
    %v2458 = vpop.f32.mrf.mxu0
    %v2459 = vadd.f32 %v2349, %v2458
    %v2460 = vpop.f32.mrf.mxu0
    %v2461 = vadd.f32 %v2349, %v2460
    %2462 = vmatmul.bf16.gmra.mxu0 %v2308
    %v2463 = vpop.f32.mrf.mxu0
    %v2464 = vadd.f32 %v2349, %v2463
    %v2465 = vpop.f32.mrf.mxu0
    %v2466 = vadd.f32 %v2349, %v2465
    %2467 = vmatmul.bf16.gmra.mxu0 %v2309
    %v2468 = vpop.f32.mrf.mxu0
    %v2469 = vadd.f32 %v2349, %v2468
    %v2470 = vpop.f32.mrf.mxu0
    %v2471 = vadd.f32 %v2349, %v2470
    %2472 = vmatmul.bf16.gmra.mxu0 %v2310
    %v2473 = vpop.f32.mrf.mxu0
    %v2474 = vadd.f32 %v2349, %v2473
    %v2475 = vpop.f32.mrf.mxu0
    %v2476 = vadd.f32 %v2349, %v2475
    %2477 = vmatmul.bf16.gmra.mxu0 %v2311
    %v2478 = vpop.f32.mrf.mxu0
    %v2479 = vadd.f32 %v2349, %v2478
    %v2480 = vpop.f32.mrf.mxu0
    %v2481 = vadd.f32 %v2349, %v2480
    %2482 = vmatmul.bf16.gmra.mxu0 %v2312
    %v2483 = vpop.f32.mrf.mxu0
    %v2484 = vadd.f32 %v2349, %v2483
    %v2485 = vpop.f32.mrf.mxu0
    %v2486 = vadd.f32 %v2349, %v2485
    %2487 = vmatmul.bf16.gmra.mxu0 %v2313
    %v2488 = vpop.f32.mrf.mxu0
    %v2489 = vadd.f32 %v2349, %v2488
    %v2490 = vpop.f32.mrf.mxu0
    %v2491 = vadd.f32 %v2349, %v2490
    %2492 = vmatmul.bf16.gmra.mxu0 %v2314
    %v2493 = vpop.f32.mrf.mxu0
    %v2494 = vadd.f32 %v2349, %v2493
    %v2495 = vpop.f32.mrf.mxu0
    %v2496 = vadd.f32 %v2349, %v2495
    %2497 = vmatmul.bf16.gmra.mxu0 %v2315
    %v2498 = vpop.f32.mrf.mxu0
    %v2499 = vadd.f32 %v2349, %v2498
    %v2500 = vpop.f32.mrf.mxu0
    %v2501 = vadd.f32 %v2349, %v2500
    %2502 = vmatmul.bf16.gmra.mxu0 %v2316
    %v2503 = vpop.f32.mrf.mxu0
    %v2504 = vadd.f32 %v2349, %v2503
    %v2505 = vpop.f32.mrf.mxu0
    %v2506 = vadd.f32 %v2349, %v2505
    %2507 = vmatmul.bf16.gmra.mxu0 %v2317
    %v2508 = vpop.f32.mrf.mxu0
    %v2509 = vadd.f32 %v2349, %v2508
    %v2510 = vpop.f32.mrf.mxu0
    %v2511 = vadd.f32 %v2349, %v2510
    %2512 = vmatmul.bf16.gmra.mxu0 %v2318
    %v2513 = vpop.f32.mrf.mxu0
    %v2514 = vadd.f32 %v2349, %v2513
    %v2515 = vpop.f32.mrf.mxu0
    %v2516 = vadd.f32 %v2349, %v2515
    %2517 = vmatmul.bf16.gmra.mxu0 %v2319
    %v2518 = vpop.f32.mrf.mxu0
    %v2519 = vadd.f32 %v2349, %v2518
    %v2520 = vpop.f32.mrf.mxu0
    %v2521 = vadd.f32 %v2349, %v2520
    %2522 = vmatmul.bf16.gmra.mxu0 %v2320
    %v2523 = vpop.f32.mrf.mxu0
    %v2524 = vadd.f32 %v2349, %v2523
    %v2525 = vpop.f32.mrf.mxu0
    %v2526 = vadd.f32 %v2349, %v2525
    %2527 = vmatmul.bf16.gmra.mxu0 %v2321
    %v2528 = vpop.f32.mrf.mxu0
    %v2529 = vadd.f32 %v2349, %v2528
    %v2530 = vpop.f32.mrf.mxu0
    %v2531 = vadd.f32 %v2349, %v2530
    %2532 = vmatmul.bf16.gmra.mxu0 %v2322
    %v2533 = vpop.f32.mrf.mxu0
    %v2534 = vadd.f32 %v2349, %v2533
    %v2535 = vpop.f32.mrf.mxu0
    %v2536 = vadd.f32 %v2349, %v2535
    %2537 = vmatmul.bf16.gmra.mxu0 %v2323
    %v2538 = vpop.f32.mrf.mxu0
    %v2539 = vadd.f32 %v2349, %v2538
    %v2540 = vpop.f32.mrf.mxu0
    %v2541 = vadd.f32 %v2349, %v2540
    %2542 = vmatmul.bf16.gmra.mxu0 %v2324
    %v2543 = vpop.f32.mrf.mxu0
    %v2544 = vadd.f32 %v2349, %v2543
    %v2545 = vpop.f32.mrf.mxu0
    %v2546 = vadd.f32 %v2349, %v2545
    %2547 = vmatmul.bf16.gmra.mxu0 %v2325
    %v2548 = vpop.f32.mrf.mxu0
    %v2549 = vadd.f32 %v2349, %v2548
    %v2550 = vpop.f32.mrf.mxu0
    %v2551 = vadd.f32 %v2349, %v2550
    %2552 = vmatmul.bf16.gmra.mxu0 %v2326
    %v2553 = vpop.f32.mrf.mxu0
    %v2554 = vadd.f32 %v2349, %v2553
    %v2555 = vpop.f32.mrf.mxu0
    %v2556 = vadd.f32 %v2349, %v2555
    %2557 = vmatmul.bf16.gmra.mxu0 %v2327
    %v2558 = vpop.f32.mrf.mxu0
    %v2559 = vadd.f32 %v2349, %v2558
    %v2560 = vpop.f32.mrf.mxu0
    %v2561 = vadd.f32 %v2349, %v2560
    %2562 = vmatmul.bf16.gmra.mxu0 %v2328
    %v2563 = vpop.f32.mrf.mxu0
    %v2564 = vadd.f32 %v2349, %v2563
    %v2565 = vpop.f32.mrf.mxu0
    %v2566 = vadd.f32 %v2349, %v2565
    %2567 = vdwg.mxu0
    %2568 = vst [vmem:[#allocation5] sm:$0xff] %v2409
    %2569 = vst [vmem:[#allocation5 + $0x8] sm:$0xff] %v2411
    %2570 = vst [vmem:[#allocation5 + $0x10] sm:$0xff] %v2414
    %2571 = vst [vmem:[#allocation5 + $0x18] sm:$0xff] %v2416
    %2572 = vst [vmem:[#allocation5 + $0x20] sm:$0xff] %v2419
    %2573 = vst [vmem:[#allocation5 + $0x28] sm:$0xff] %v2421
    %2574 = vst [vmem:[#allocation5 + $0x30] sm:$0xff] %v2424
    %2575 = vst [vmem:[#allocation5 + $0x38] sm:$0xff] %v2426
    %2576 = vst [vmem:[#allocation5 + $0x40] sm:$0xff] %v2429
    %2577 = vst [vmem:[#allocation5 + $0x48] sm:$0xff] %v2431
    %2578 = vst [vmem:[#allocation5 + $0x50] sm:$0xff] %v2434
    %2579 = vst [vmem:[#allocation5 + $0x58] sm:$0xff] %v2436
    %2580 = vst [vmem:[#allocation5 + $0x60] sm:$0xff] %v2439
    %2581 = vst [vmem:[#allocation5 + $0x68] sm:$0xff] %v2441
    %2582 = vst [vmem:[#allocation5 + $0x70] sm:$0xff] %v2444
    %2583 = vst [vmem:[#allocation5 + $0x78] sm:$0xff] %v2446
    %2584 = vst [vmem:[#allocation5 + $0x80] sm:$0xff] %v2449
    %2585 = vst [vmem:[#allocation5 + $0x88] sm:$0xff] %v2451
    %2586 = vst [vmem:[#allocation5 + $0x90] sm:$0xff] %v2454
    %2587 = vst [vmem:[#allocation5 + $0x98] sm:$0xff] %v2456
    %2588 = vst [vmem:[#allocation5 + $0xa0] sm:$0xff] %v2459
    %2589 = vst [vmem:[#allocation5 + $0xa8] sm:$0xff] %v2461
    %2590 = vst [vmem:[#allocation5 + $0xb0] sm:$0xff] %v2464
    %2591 = vst [vmem:[#allocation5 + $0xb8] sm:$0xff] %v2466
    %2592 = vst [vmem:[#allocation5 + $0xc0] sm:$0xff] %v2469
    %2593 = vst [vmem:[#allocation5 + $0xc8] sm:$0xff] %v2471
    %2594 = vst [vmem:[#allocation5 + $0xd0] sm:$0xff] %v2474
    %2595 = vst [vmem:[#allocation5 + $0xd8] sm:$0xff] %v2476
    %2596 = vst [vmem:[#allocation5 + $0xe0] sm:$0xff] %v2479
    %2597 = vst [vmem:[#allocation5 + $0xe8] sm:$0xff] %v2481
    %2598 = vst [vmem:[#allocation5 + $0xf0] sm:$0xff] %v2484
    %2599 = vst [vmem:[#allocation5 + $0xf8] sm:$0xff] %v2486
    %2600 = vst [vmem:[#allocation5 + $0x100] sm:$0xff] %v2489
    %2601 = vst [vmem:[#allocation5 + $0x108] sm:$0xff] %v2491
    %2602 = vst [vmem:[#allocation5 + $0x110] sm:$0xff] %v2494
    %2603 = vst [vmem:[#allocation5 + $0x118] sm:$0xff] %v2496
    %2604 = vst [vmem:[#allocation5 + $0x120] sm:$0xff] %v2499
    %2605 = vst [vmem:[#allocation5 + $0x128] sm:$0xff] %v2501
    %2606 = vst [vmem:[#allocation5 + $0x130] sm:$0xff] %v2504
    %2607 = vst [vmem:[#allocation5 + $0x138] sm:$0xff] %v2506
    %2608 = vst [vmem:[#allocation5 + $0x140] sm:$0xff] %v2509
    %2609 = vst [vmem:[#allocation5 + $0x148] sm:$0xff] %v2511
    %2610 = vst [vmem:[#allocation5 + $0x150] sm:$0xff] %v2514
    %2611 = vst [vmem:[#allocation5 + $0x158] sm:$0xff] %v2516
    %2612 = vst [vmem:[#allocation5 + $0x160] sm:$0xff] %v2519
    %2613 = vst [vmem:[#allocation5 + $0x168] sm:$0xff] %v2521
    %2614 = vst [vmem:[#allocation5 + $0x170] sm:$0xff] %v2524
    %2615 = vst [vmem:[#allocation5 + $0x178] sm:$0xff] %v2526
    %2616 = vst [vmem:[#allocation5 + $0x180] sm:$0xff] %v2529
    %2617 = vst [vmem:[#allocation5 + $0x188] sm:$0xff] %v2531
    %2618 = vst [vmem:[#allocation5 + $0x190] sm:$0xff] %v2534
    %2619 = vst [vmem:[#allocation5 + $0x198] sm:$0xff] %v2536
    %2620 = vst [vmem:[#allocation5 + $0x1a0] sm:$0xff] %v2539
    %2621 = vst [vmem:[#allocation5 + $0x1a8] sm:$0xff] %v2541
    %2622 = vst [vmem:[#allocation5 + $0x1b0] sm:$0xff] %v2544
    %2623 = vst [vmem:[#allocation5 + $0x1b8] sm:$0xff] %v2546
    %2624 = vst [vmem:[#allocation5 + $0x1c0] sm:$0xff] %v2549
    %2625 = vst [vmem:[#allocation5 + $0x1c8] sm:$0xff] %v2551
    %2626 = vst [vmem:[#allocation5 + $0x1d0] sm:$0xff] %v2554
    %2627 = vst [vmem:[#allocation5 + $0x1d8] sm:$0xff] %v2556
    %2628 = vst [vmem:[#allocation5 + $0x1e0] sm:$0xff] %v2559
    %2629 = vst [vmem:[#allocation5 + $0x1e8] sm:$0xff] %v2561
    %2630 = vst [vmem:[#allocation5 + $0x1f0] sm:$0xff] %v2564
    %2631 = vst [vmem:[#allocation5 + $0x1f8] sm:$0xff] %v2566
    // Predicated region
    $region18: #{tpu_custom_call.1} parent=1 // pred_check
      _
    $region19: #{tpu_custom_call.1} parent=1 // pred_check_branch
      %2633 = sbr.rel (0) target = $region21
    $region20: #{tpu_custom_call.1} parent=1 // pred_region
      %2635 = vsyncadd [#allocation4], 0
      %s2636 = sshll.u32 [#allocation5], 4
      %s2637 = int_to_ptr.vmem [resolvable:$true] %s2636
      %s2638 = sshll.u32 %s3, 4
      %s2639 = int_to_ptr.hbm [resolvable:$true] %s2638
      %2644 = dma.vmem_to_hbm [thread:$0]  %s2637, 8192, %s2639, [#allocation4], 128, 128, 8
    $region21: #{tpu_custom_call.1} parent=1 // pred_fallthru
      _
    // Predicated region
    $region22: #{tpu_custom_call.1} parent=1 // pred_check
      _
    $region23: #{tpu_custom_call.1} parent=1 // pred_check_branch
      %2646 = sbr.rel (0) target = $region25
    $region24: #{tpu_custom_call.1} parent=1 // pred_region
      %2648 = dma.done [#allocation4], 8192
    $region25: #{tpu_custom_call.1} parent=1 // pred_fallthru
      _
    %2649 = vsyncpa [#allocation3], 1
    %2650 = vsyncpa [#allocation4], 1

</llo_original>
